<compile_context>
chip_gen: v7x
topology: tpu7x:2x2x1
jax: 0.10.0
libtpu: 0.0.40
codegen_flags: <defaults>
</compile_context>

<pallas_src>
import functools

import jax
import jax.numpy as jnp
from jax.experimental import pallas as pl
from jax.experimental.pallas import tpu as pltpu


# ------------------------------------------------------------------------------------
# tiling / budget helpers
# ------------------------------------------------------------------------------------
def _vmem_limit(*operand_block_bytes):
    """Explicit scoped-VMEM budget: double-buffered blocks + slack, clamped to [16, 40] MiB."""
    est = 2 * sum(int(b) for b in operand_block_bytes) + (4 << 20)
    return int(min(40 << 20, max(16 << 20, est)))


def _choose_row_tile(P, min_programs=4, cap=512):
    """Fixed row tile (multiple of 8, <= cap) giving >= min_programs steps via a cdiv grid."""
    tp = -(-P // min_programs)
    tp = 8 * (-(-tp // 8))
    return int(min(cap, max(8, tp)))


def _choose_h_tile(N, Ho, Wo, min_programs=4, max_rows=512):
    """Output-row tile for the fused conv: divisor of Ho, <= max_rows flattened rows,
    preferring >= min_programs total grid steps (>= 2 per TensorCore on megacore parts)."""
    divisors = [d for d in range(1, Ho + 1) if Ho % d == 0]
    fits = [d for d in divisors if d * Wo <= max_rows] or [1]
    for th in sorted(fits, reverse=True):
        if N * (Ho // th) >= min_programs:
            return th
    return max(fits)


# ------------------------------------------------------------------------------------
# Pallas kernels
# ------------------------------------------------------------------------------------
def _matmul_bias_act_kernel(x_ref, w_ref, b_ref, o_ref, *, relu):
    """y = maybe_relu(cols @ w + bias).  BN scale pre-folded into the weight columns."""
    y = jnp.dot(x_ref[...], w_ref[...], preferred_element_type=jnp.float32) + b_ref[...]
    if relu:
        y = jnp.maximum(y, 0.0)
    o_ref[...] = y.astype(o_ref.dtype)


def _fused_conv3x3_kernel(*refs, th, wo, relu, mode):
    """3x3 / stride-1 / pad-1 conv with in-kernel im2col (9 accumulated bf16 MXU matmuls),
    folded-BN bias, optional fused residual branch, and ReLU.

    refs = (x_pad, w_taps, bias[, shortcut refs...], out)
      mode is None  : plain conv
      mode == "id"  : + identity residual      (extra ref : res   (1, th, wo, Cout))
      mode == "proj": + 1x1-conv projection    (extra refs: xs (1, th, wo, Cin), wsc (Cin, Cout))
    """
    x_ref, w_ref, b_ref = refs[0], refs[1], refs[2]
    o_ref = refs[-1]
    c = x_ref.shape[-1]
    cout = w_ref.shape[-1]
    rows = th * wo
    row0 = pl.program_id(1) * th

    # Rows [row0, row0+th+2) of the VMEM-resident padded image cover this tile's 3x3 halo.
    win = x_ref[0, pl.ds(row0, th + 2)]                       # (th+2, wo+2, c) bf16
    acc = jnp.zeros((rows, cout), jnp.float32)
    for dh in range(3):
        for dw in range(3):
            patch = win[dh:dh + th, dw:dw + wo, :].reshape(rows, c)
            acc += jnp.dot(patch, w_ref[3 * dh + dw],
                           preferred_element_type=jnp.float32)
    acc += b_ref[...]                                         # folded BN bias (1, Cout)

    if mode == "proj":        # fused 1x1-conv shortcut; its BN bias is pre-summed into b_ref
        xs_ref, wsc_ref = refs[3], refs[4]
        acc += jnp.dot(xs_ref[0].reshape(rows, xs_ref.shape[-1]), wsc_ref[...],
                       preferred_element_type=jnp.float32)
    elif mode == "id":        # identity residual
        acc += refs[3][0].reshape(rows, cout).astype(jnp.float32)

    if relu:
        acc = jnp.maximum(acc, 0.0)
    o_ref[0] = acc.reshape(th, wo, cout).astype(o_ref.dtype)


# ------------------------------------------------------------------------------------
# Pallas wrappers
# ------------------------------------------------------------------------------------
def conv_matmul(cols, w, b, *, relu=True, out_dtype=jnp.bfloat16):
    """cols:(P,K) bf16, w:(K,Cout) bf16 (BN scale folded, K padded to 128), b:(1,Cout) f32."""
    P, K = cols.shape
    Cout = w.shape[1]
    tp = _choose_row_tile(P)
    n_blk = -(-P // tp)
    Pp = n_blk * tp
    if Pp != P:                                 # cdiv grid: zero-pad rows, slice afterwards
        cols = jnp.pad(cols, ((0, Pp - P), (0, 0)))
    out = pl.pallas_call(
        functools.partial(_matmul_bias_act_kernel, relu=relu),
        grid=(n_blk,),
        in_specs=[pl.BlockSpec((tp, K), lambda i: (i, 0)),
                  pl.BlockSpec((K, Cout), lambda i: (0, 0)),
                  pl.BlockSpec((1, Cout), lambda i: (0, 0))],
        out_specs=pl.BlockSpec((tp, Cout), lambda i: (i, 0)),
        out_shape=jax.ShapeDtypeStruct((Pp, Cout), out_dtype),
        compiler_params=pltpu.CompilerParams(
            dimension_semantics=("parallel",),
            vmem_limit_bytes=_vmem_limit(tp * K * 2, K * Cout * 2, Cout * 4, tp * Cout * 2)),
    )(cols, w, b)
    return out[:P] if Pp != P else out


def fused_conv3x3(xp, w_taps, b, *, shortcut=None, relu=True, out_dtype=jnp.bfloat16):
    """Stride-1 3x3 conv with in-kernel im2col (no HBM cols materialization).

    xp:      (N, Ho+2, Wo+2, C) bf16   spatially pre-padded NHWC activation
    w_taps:  (9, C, Cout)       bf16   BN scale folded into output columns
    b:       (1, Cout)          f32    folded BN bias (incl. shortcut BN bias when fused)
    shortcut: None | ("id", res(N,Ho,Wo,Cout)) | ("proj", xs(N,Ho,Wo,Cin), wsc(Cin,Cout))
    """
    N, Hp, Wp, C = xp.shape
    Ho, Wo = Hp - 2, Wp - 2
    Cout = w_taps.shape[-1]
    th = _choose_h_tile(N, Ho, Wo)
    grid = (N, Ho // th)

    # Image block index is constant over the row axis -> DMA'd once per batch, stays resident.
    in_specs = [pl.BlockSpec((1, Hp, Wp, C), lambda n, r: (n, 0, 0, 0)),
                pl.BlockSpec((9, C, Cout), lambda n, r: (0, 0, 0)),
                pl.BlockSpec((1, Cout), lambda n, r: (0, 0))]
    args = [xp, w_taps, b]
    blk_bytes = [Hp * Wp * C * 2, 9 * C * Cout * 2, Cout * 4, th * Wo * Cout * 2]

    mode = None if shortcut is None else shortcut[0]
    if mode == "proj":
        _, xs, wsc = shortcut
        Cin = xs.shape[-1]
        in_specs += [pl.BlockSpec((1, th, Wo, Cin), lambda n, r: (n, r, 0, 0)),
                     pl.BlockSpec((Cin, Cout), lambda n, r: (0, 0))]
        args += [xs, wsc]
        blk_bytes += [th * Wo * Cin * 2, Cin * Cout * 2]
    elif mode == "id":
        res = shortcut[1]
        in_specs += [pl.BlockSpec((1, th, Wo, Cout), lambda n, r: (n, r, 0, 0))]
        args += [res]
        blk_bytes += [th * Wo * Cout * 2]

    return pl.pallas_call(
        functools.partial(_fused_conv3x3_kernel, th=th, wo=Wo, relu=relu, mode=mode),
        grid=grid,
        in_specs=in_specs,
        out_specs=pl.BlockSpec((1, th, Wo, Cout), lambda n, r: (n, r, 0, 0)),
        out_shape=jax.ShapeDtypeStruct((N, Ho, Wo, Cout), out_dtype),
        compiler_params=pltpu.CompilerParams(
            dimension_semantics=("parallel", "parallel"),
            vmem_limit_bytes=_vmem_limit(*blk_bytes)),
    )(*args)


# ------------------------------------------------------------------------------------
# im2col glue for the *strided* conv1 only (bf16, output-resolution taps, K lane-padded)
# ------------------------------------------------------------------------------------
def _im2col3x3_strided(x, stride):
    """(N,H,W,C) bf16 -> (N*Ho*Wo, Kp) bf16 patches for a 3x3 / pad-1 / stride-s conv."""
    N, H, W, C = x.shape
    Ho = (H - 1) // stride + 1
    Wo = (W - 1) // stride + 1
    xp = jnp.pad(x, ((0, 0), (1, 1), (1, 1), (0, 0)))
    taps = [xp[:, dh:dh + stride * (Ho - 1) + 1:stride,
                  dw:dw + stride * (Wo - 1) + 1:stride, :]
            for dh in range(3) for dw in range(3)]
    K = 9 * C
    Kp = 128 * (-(-K // 128))
    if Kp != K:                                       # lane-align K to a multiple of 128
        taps.append(jnp.zeros((N, Ho, Wo, Kp - K), x.dtype))
    cols = jnp.concatenate(taps, axis=-1).reshape(N * Ho * Wo, Kp)
    return cols, (N, Ho, Wo)


# ------------------------------------------------------------------------------------
# BasicBlock forward
# ------------------------------------------------------------------------------------
def basic_block_forward(kern, x_nchw):
    stride = kern["stride"]
    x = jnp.transpose(x_nchw, (0, 2, 3, 1)).astype(jnp.bfloat16)   # NCHW -> NHWC, bf16
    N, H, W, Cin = x.shape
    planes = kern["b1"].shape[1]

    # ---- conv1 + bn1 + relu ---------------------------------------------------------
    if stride == 1:
        xp = jnp.pad(x, ((0, 0), (1, 1), (1, 1), (0, 0)))
        h = fused_conv3x3(xp, kern["w1_taps"], kern["b1"], relu=True)          # bf16 NHWC
        Ho, Wo = H, W
    else:
        # TODO(synk): in-kernel im2col for strided convs; wrapper-side bf16 im2col for now.
        cols1, (N, Ho, Wo) = _im2col3x3_strided(x, stride)
        h = conv_matmul(cols1, kern["w1_mat"], kern["b1"], relu=True)
        h = h.reshape(N, Ho, Wo, planes)                                       # bf16 NHWC

    # ---- conv2 + bn2 + shortcut + relu (single fused kernel, in-kernel im2col) -------
    hp = jnp.pad(h, ((0, 0), (1, 1), (1, 1), (0, 0)))
    if kern["wsc"] is not None:
        xs = x[:, ::stride, ::stride, :]                                       # (N,Ho,Wo,Cin)
        out = fused_conv3x3(hp, kern["w2_taps"], kern["b2sc"], relu=True,
                            shortcut=("proj", xs, kern["wsc"]))
    else:
        out = fused_conv3x3(hp, kern["w2_taps"], kern["b2"], relu=True,
                            shortcut=("id", x))
    # Block output stays bf16 NHWC inside the kernel; convert only at the module boundary.
    return jnp.transpose(out, (0, 3, 1, 2)).astype(jnp.float32)                # NHWC -> NCHW


# ------------------------------------------------------------------------------------
# Deterministic parameters (PyTorch shapes; BN folded + bf16 for the kernels,
# raw f32 copies kept for the pure-JAX reference check)
# ------------------------------------------------------------------------------------
def _bn_fold(key, c, eps=1e-5):
    k1, k2, k3, k4 = jax.random.split(key, 4)
    gamma = 1.0 + 0.1 * jax.random.normal(k1, (c,))
    beta = 0.1 * jax.random.normal(k2, (c,))
    mean = 0.1 * jax.random.normal(k3, (c,))
    var = 1.0 + 0.1 * jnp.abs(jax.random.normal(k4, (c,)))
    scale = (gamma / jnp.sqrt(var + eps)).astype(jnp.float32)
    bias = (beta - mean * scale).astype(jnp.float32)
    return scale, bias


def init_basic_block(key, in_planes, planes, stride):
    def taps3x3(w_oihw, scale):     # (Cout,Cin,3,3) -> (9, Cin, Cout) bf16, BN-scaled
        t = jnp.transpose(w_oihw, (2, 3, 1, 0)).reshape(9, w_oihw.shape[1], w_oihw.shape[0])
        return (t * scale[None, None, :]).astype(jnp.bfloat16)

    def mat3x3(w_oihw, scale):      # (Cout,Cin,3,3) -> (Kp, Cout) bf16, rows padded to 128
        m = jnp.transpose(w_oihw, (2, 3, 1, 0)).reshape(-1, w_oihw.shape[0]) * scale[None, :]
        K = m.shape[0]
        Kp = 128 * (-(-K // 128))
        if Kp != K:
            m = jnp.pad(m, ((0, Kp - K), (0, 0)))
        return m.astype(jnp.bfloat16)

    raw, kern = {}, {"stride": stride}
    key, k = jax.random.split(key)
    w1 = (jax.random.normal(k, (planes, in_planes, 3, 3))
          * jnp.sqrt(2.0 / (9 * in_planes))).astype(jnp.float32)
    key, k = jax.random.split(key); s1, b1 = _bn_fold(k, planes)
    key, k = jax.random.split(key)
    w2 = (jax.random.normal(k, (planes, planes, 3, 3))
          * jnp.sqrt(2.0 / (9 * planes))).astype(jnp.float32)
    key, k = jax.random.split(key); s2, b2 = _bn_fold(k, planes)
    raw.update(w1=w1, s1=s1, b1=b1, w2=w2, s2=s2, b2=b2, wsc=None)

    kern["w1_taps"], kern["w1_mat"] = taps3x3(w1, s1), mat3x3(w1, s1)
    kern["b1"] = b1.reshape(1, -1)
    kern["w2_taps"], kern["b2"] = taps3x3(w2, s2), b2.reshape(1, -1)

    if stride != 1 or in_planes != planes:                 # BasicBlock.expansion == 1
        key, k = jax.random.split(key)
        wsc = (jax.random.normal(k, (planes, in_planes, 1, 1))
               * jnp.sqrt(2.0 / in_planes)).astype(jnp.float32)
        key, k = jax.random.split(key); ssc, bsc = _bn_fold(k, planes)
        raw.update(wsc=wsc, ssc=ssc, bsc=bsc)
        kern["wsc"] = (jnp.transpose(wsc[:, :, 0, 0]) * ssc[None, :]).astype(jnp.bfloat16)
        kern["b2sc"] = (b2 + bsc).reshape(1, -1)           # shortcut BN bias pre-summed (review)
    else:
        kern["wsc"] = None
    return kern, raw


def basic_block_reference(raw, stride, x_nchw):
    dn = ("NCHW", "OIHW", "NCHW")
    conv = lambda x, w, s, p: jax.lax.conv_general_dilated(
        x, w, (s, s), ((p, p), (p, p)), dimension_numbers=dn)
    bn = lambda x, sc, bi: x * sc[None, :, None, None] + bi[None, :, None, None]
    x = x_nchw.astype(jnp.float32)
    h = jax.nn.relu(bn(conv(x, raw["w1"], stride, 1), raw["s1"], raw["b1"]))
    o = bn(conv(h, raw["w2"], 1, 1), raw["s2"], raw["b2"])
    sc = (bn(conv(x, raw["wsc"], stride, 0), raw["ssc"], raw["bsc"])
          if raw["wsc"] is not None else x)
    return jax.nn.relu(o + sc)


# ------------------------------------------------------------------------------------
if __name__ == "__main__":
    key = jax.random.PRNGKey(0)
    kx, kp1, kp2 = jax.random.split(key, 3)
    x = jax.random.normal(kx, (2, 64, 16, 16), dtype=jnp.float32)       # NCHW

    def check(kern, raw, stride, expect_shape):
        fwd = jax.jit(functools.partial(basic_block_forward, kern))
        out = jax.block_until_ready(fwd(x))
        assert out.shape == expect_shape, out.shape
        assert bool(jnp.all(jnp.isfinite(out)))
        ref = basic_block_reference(raw, stride, x)
        err = float(jnp.max(jnp.abs(out - ref)))
        tol = 0.05 * (float(jnp.max(jnp.abs(ref))) + 1.0)   # loose: bf16 operands/activations
        assert err <= tol, f"mismatch vs reference: max|diff|={err}, tol={tol}"

    # 1) BasicBlock(64 -> 128, stride=2): exercises the strided conv1 matmul kernel and the
    #    fused conv2 kernel with the projection shortcut folded in as an extra tap.
    kern1, raw1 = init_basic_block(kp1, 64, 128, 2)
    check(kern1, raw1, 2, (2, 128, 8, 8))

    # 2) BasicBlock(64 -> 64, stride=1): exercises the fully fused in-kernel-im2col path for
    #    both convs and the fused identity residual.
    kern2, raw2 = init_basic_block(kp2, 64, 64, 1)
    check(kern2, raw2, 1, (2, 64, 16, 16))

    print("KERNEL_OK")
</pallas_src>

<mosaic_0001>
module attributes {stable_mosaic.version = 11 : i64} {
  func.func @_matmul_bias_act_kernel(%arg0: i32, %arg1: memref<32x640xbf16, #tpu.memory_space<vmem>>, %arg2: memref<640x128xbf16, #tpu.memory_space<vmem>>, %arg3: memref<1x128xf32, #tpu.memory_space<vmem>>, %arg4: memref<32x128xbf16, #tpu.memory_space<vmem>>) attributes {dimension_semantics = [#tpu.dimension_semantics<parallel>], iteration_bounds = array<i64: 4>, scalar_prefetch = 0 : i64, scratch_operands = 0 : i64, tpu.core_type = #tpu.core_type<tc>, window_params = [{transform_indices = @transform_0, window_bounds = array<i64: 32, 640>}, {pipeline_mode = #tpu.pipeline_mode<synchronous>, transform_indices = @transform_1, window_bounds = array<i64: 640, 128>}, {pipeline_mode = #tpu.pipeline_mode<synchronous>, transform_indices = @transform_2, window_bounds = array<i64: 1, 128>}, {transform_indices = @transform_3, window_bounds = array<i64: 32, 128>}]} {
    %c0 = arith.constant 0 : index
    %c0_0 = arith.constant 0 : index
    %0 = vector.load %arg1[%c0, %c0_0] : memref<32x640xbf16, #tpu.memory_space<vmem>>, vector<32x640xbf16>
    %c0_1 = arith.constant 0 : index
    %c0_2 = arith.constant 0 : index
    %1 = vector.load %arg2[%c0_1, %c0_2] : memref<640x128xbf16, #tpu.memory_space<vmem>>, vector<640x128xbf16>
    %cst = arith.constant dense<0.000000e+00> : vector<32x128xf32>
    %2 = tpu.matmul %0, %1, %cst {dimension_numbers = #tpu.dot_dimension_numbers<[1], [0], [0], [1], [0, 0, 1, 1], [], []>} : vector<32x640xbf16>, vector<640x128xbf16>, vector<32x128xf32> -> vector<32x128xf32>
    %c0_3 = arith.constant 0 : index
    %c0_4 = arith.constant 0 : index
    %3 = vector.load %arg3[%c0_3, %c0_4] : memref<1x128xf32, #tpu.memory_space<vmem>>, vector<1x128xf32>
    %4 = vector.broadcast %3 : vector<1x128xf32> to vector<32x128xf32>
    %5 = arith.addf %2, %4 : vector<32x128xf32>
    %cst_5 = arith.constant 0.000000e+00 : f32
    %6 = vector.broadcast %cst_5 : f32 to vector<32x128xf32>
    %7 = arith.maximumf %5, %6 : vector<32x128xf32>
    %8 = arith.truncf %7 : vector<32x128xf32> to vector<32x128xbf16>
    %c0_6 = arith.constant 0 : index
    %c0_7 = arith.constant 0 : index
    %9 = vector.load %arg4[%c0_6, %c0_7] : memref<32x128xbf16, #tpu.memory_space<vmem>>, vector<32x128xbf16>
    tpu.vector_store %arg4[%c0_6, %c0_7], %8 {strides = array<i32>} : memref<32x128xbf16, #tpu.memory_space<vmem>>, vector<32x128xbf16>,
    return
  }
  func.func @transform_0(%arg0: i32) -> (i32, i32) {
    %c0_i32 = arith.constant 0 : i32
    %c0_i32_0 = arith.constant 0 : i32
    return %arg0, %c0_i32 : i32, i32
  }
  func.func @transform_1(%arg0: i32) -> (i32, i32) {
    %c0_i32 = arith.constant 0 : i32
    %c0_i32_0 = arith.constant 0 : i32
    %c0_i32_1 = arith.constant 0 : i32
    return %c0_i32, %c0_i32_0 : i32, i32
  }
  func.func @transform_2(%arg0: i32) -> (i32, i32) {
    %c0_i32 = arith.constant 0 : i32
    %c0_i32_0 = arith.constant 0 : i32
    %c0_i32_1 = arith.constant 0 : i32
    return %c0_i32, %c0_i32_0 : i32, i32
  }
  func.func @transform_3(%arg0: i32) -> (i32, i32) {
    %c0_i32 = arith.constant 0 : i32
    %c0_i32_0 = arith.constant 0 : i32
    return %arg0, %c0_i32 : i32, i32
  }
}

module attributes {stable_mosaic.version = 11 : i64} {
  func.func @_fused_conv3x3_kernel(%arg0: i32, %arg1: i32, %arg2: memref<1x10x10x128xbf16, #tpu.memory_space<vmem>>, %arg3: memref<9x128x128xbf16, #tpu.memory_space<vmem>>, %arg4: memref<1x128xf32, #tpu.memory_space<vmem>>, %arg5: memref<1x4x8x64xbf16, #tpu.memory_space<vmem>>, %arg6: memref<64x128xbf16, #tpu.memory_space<vmem>>, %arg7: memref<1x4x8x128xbf16, #tpu.memory_space<vmem>>) attributes {dimension_semantics = [#tpu.dimension_semantics<parallel>, #tpu.dimension_semantics<parallel>], iteration_bounds = array<i64: 2, 2>, scalar_prefetch = 0 : i64, scratch_operands = 0 : i64, tpu.core_type = #tpu.core_type<tc>, window_params = [{transform_indices = @transform_0, window_bounds = array<i64: 1, 10, 10, 128>}, {pipeline_mode = #tpu.pipeline_mode<synchronous>, transform_indices = @transform_1, window_bounds = array<i64: 9, 128, 128>}, {pipeline_mode = #tpu.pipeline_mode<synchronous>, transform_indices = @transform_2, window_bounds = array<i64: 1, 128>}, {transform_indices = @transform_3, window_bounds = array<i64: 1, 4, 8, 64>}, {pipeline_mode = #tpu.pipeline_mode<synchronous>, transform_indices = @transform_4, window_bounds = array<i64: 64, 128>}, {transform_indices = @transform_5, window_bounds = array<i64: 1, 4, 8, 128>}]} {
    %c4_i32 = arith.constant 4 : i32
    %0 = arith.muli %arg1, %c4_i32 : i32
    %c0 = arith.constant 0 : index
    %1 = arith.index_cast %0 : i32 to index
    %c0_0 = arith.constant 0 : index
    %c0_1 = arith.constant 0 : index
    %2 = vector.load %arg2[%c0, %1, %c0_0, %c0_1] : memref<1x10x10x128xbf16, #tpu.memory_space<vmem>>, vector<1x6x10x128xbf16>
    %3 = vector.shape_cast %2 : vector<1x6x10x128xbf16> to vector<6x10x128xbf16>
    %cst = arith.constant 0.000000e+00 : f32
    %4 = vector.broadcast %cst : f32 to vector<32x128xf32>
    %5 = vector.extract_strided_slice %3 {offsets = [0, 0, 0], sizes = [4, 8, 128], strides = [1, 1, 1]} : vector<6x10x128xbf16> to vector<4x8x128xbf16>
    %6 = vector.shape_cast %5 : vector<4x8x128xbf16> to vector<32x128xbf16>
    %c0_2 = arith.constant 0 : index
    %c0_3 = arith.constant 0 : index
    %c0_4 = arith.constant 0 : index
    %7 = vector.load %arg3[%c0_2, %c0_3, %c0_4] : memref<9x128x128xbf16, #tpu.memory_space<vmem>>, vector<1x128x128xbf16>
    %8 = vector.shape_cast %7 : vector<1x128x128xbf16> to vector<128x128xbf16>
    %cst_5 = arith.constant dense<0.000000e+00> : vector<32x128xf32>
    %9 = tpu.matmul %6, %8, %cst_5 {dimension_numbers = #tpu.dot_dimension_numbers<[1], [0], [0], [1], [0, 0, 1, 1], [], []>} : vector<32x128xbf16>, vector<128x128xbf16>, vector<32x128xf32> -> vector<32x128xf32>
    %10 = arith.addf %4, %9 : vector<32x128xf32>
    %11 = vector.extract_strided_slice %3 {offsets = [0, 1, 0], sizes = [4, 8, 128], strides = [1, 1, 1]} : vector<6x10x128xbf16> to vector<4x8x128xbf16>
    %12 = vector.shape_cast %11 : vector<4x8x128xbf16> to vector<32x128xbf16>
    %c1 = arith.constant 1 : index
    %c0_6 = arith.constant 0 : index
    %c0_7 = arith.constant 0 : index
    %13 = vector.load %arg3[%c1, %c0_6, %c0_7] : memref<9x128x128xbf16, #tpu.memory_space<vmem>>, vector<1x128x128xbf16>
    %14 = vector.shape_cast %13 : vector<1x128x128xbf16> to vector<128x128xbf16>
    %cst_8 = arith.constant dense<0.000000e+00> : vector<32x128xf32>
    %15 = tpu.matmul %12, %14, %cst_8 {dimension_numbers = #tpu.dot_dimension_numbers<[1], [0], [0], [1], [0, 0, 1, 1], [], []>} : vector<32x128xbf16>, vector<128x128xbf16>, vector<32x128xf32> -> vector<32x128xf32>
    %16 = arith.addf %10, %15 : vector<32x128xf32>
    %17 = vector.extract_strided_slice %3 {offsets = [0, 2, 0], sizes = [4, 8, 128], strides = [1, 1, 1]} : vector<6x10x128xbf16> to vector<4x8x128xbf16>
    %18 = vector.shape_cast %17 : vector<4x8x128xbf16> to vector<32x128xbf16>
    %c2 = arith.constant 2 : index
    %c0_9 = arith.constant 0 : index
    %c0_10 = arith.constant 0 : index
    %19 = vector.load %arg3[%c2, %c0_9, %c0_10] : memref<9x128x128xbf16, #tpu.memory_space<vmem>>, vector<1x128x128xbf16>
    %20 = vector.shape_cast %19 : vector<1x128x128xbf16> to vector<128x128xbf16>
    %cst_11 = arith.constant dense<0.000000e+00> : vector<32x128xf32>
    %21 = tpu.matmul %18, %20, %cst_11 {dimension_numbers = #tpu.dot_dimension_numbers<[1], [0], [0], [1], [0, 0, 1, 1], [], []>} : vector<32x128xbf16>, vector<128x128xbf16>, vector<32x128xf32> -> vector<32x128xf32>
    %22 = arith.addf %16, %21 : vector<32x128xf32>
    %23 = vector.extract_strided_slice %3 {offsets = [1, 0, 0], sizes = [4, 8, 128], strides = [1, 1, 1]} : vector<6x10x128xbf16> to vector<4x8x128xbf16>
    %24 = vector.shape_cast %23 : vector<4x8x128xbf16> to vector<32x128xbf16>
    %c3 = arith.constant 3 : index
    %c0_12 = arith.constant 0 : index
    %c0_13 = arith.constant 0 : index
    %25 = vector.load %arg3[%c3, %c0_12, %c0_13] : memref<9x128x128xbf16, #tpu.memory_space<vmem>>, vector<1x128x128xbf16>
    %26 = vector.shape_cast %25 : vector<1x128x128xbf16> to vector<128x128xbf16>
    %cst_14 = arith.constant dense<0.000000e+00> : vector<32x128xf32>
    %27 = tpu.matmul %24, %26, %cst_14 {dimension_numbers = #tpu.dot_dimension_numbers<[1], [0], [0], [1], [0, 0, 1, 1], [], []>} : vector<32x128xbf16>, vector<128x128xbf16>, vector<32x128xf32> -> vector<32x128xf32>
    %28 = arith.addf %22, %27 : vector<32x128xf32>
    %29 = vector.extract_strided_slice %3 {offsets = [1, 1, 0], sizes = [4, 8, 128], strides = [1, 1, 1]} : vector<6x10x128xbf16> to vector<4x8x128xbf16>
    %30 = vector.shape_cast %29 : vector<4x8x128xbf16> to vector<32x128xbf16>
    %c4 = arith.constant 4 : index
    %c0_15 = arith.constant 0 : index
    %c0_16 = arith.constant 0 : index
    %31 = vector.load %arg3[%c4, %c0_15, %c0_16] : memref<9x128x128xbf16, #tpu.memory_space<vmem>>, vector<1x128x128xbf16>
    %32 = vector.shape_cast %31 : vector<1x128x128xbf16> to vector<128x128xbf16>
    %cst_17 = arith.constant dense<0.000000e+00> : vector<32x128xf32>
    %33 = tpu.matmul %30, %32, %cst_17 {dimension_numbers = #tpu.dot_dimension_numbers<[1], [0], [0], [1], [0, 0, 1, 1], [], []>} : vector<32x128xbf16>, vector<128x128xbf16>, vector<32x128xf32> -> vector<32x128xf32>
    %34 = arith.addf %28, %33 : vector<32x128xf32>
    %35 = vector.extract_strided_slice %3 {offsets = [1, 2, 0], sizes = [4, 8, 128], strides = [1, 1, 1]} : vector<6x10x128xbf16> to vector<4x8x128xbf16>
    %36 = vector.shape_cast %35 : vector<4x8x128xbf16> to vector<32x128xbf16>
    %c5 = arith.constant 5 : index
    %c0_18 = arith.constant 0 : index
    %c0_19 = arith.constant 0 : index
    %37 = vector.load %arg3[%c5, %c0_18, %c0_19] : memref<9x128x128xbf16, #tpu.memory_space<vmem>>, vector<1x128x128xbf16>
    %38 = vector.shape_cast %37 : vector<1x128x128xbf16> to vector<128x128xbf16>
    %cst_20 = arith.constant dense<0.000000e+00> : vector<32x128xf32>
    %39 = tpu.matmul %36, %38, %cst_20 {dimension_numbers = #tpu.dot_dimension_numbers<[1], [0], [0], [1], [0, 0, 1, 1], [], []>} : vector<32x128xbf16>, vector<128x128xbf16>, vector<32x128xf32> -> vector<32x128xf32>
    %40 = arith.addf %34, %39 : vector<32x128xf32>
    %41 = vector.extract_strided_slice %3 {offsets = [2, 0, 0], sizes = [4, 8, 128], strides = [1, 1, 1]} : vector<6x10x128xbf16> to vector<4x8x128xbf16>
    %42 = vector.shape_cast %41 : vector<4x8x128xbf16> to vector<32x128xbf16>
    %c6 = arith.constant 6 : index
    %c0_21 = arith.constant 0 : index
    %c0_22 = arith.constant 0 : index
    %43 = vector.load %arg3[%c6, %c0_21, %c0_22] : memref<9x128x128xbf16, #tpu.memory_space<vmem>>, vector<1x128x128xbf16>
    %44 = vector.shape_cast %43 : vector<1x128x128xbf16> to vector<128x128xbf16>
    %cst_23 = arith.constant dense<0.000000e+00> : vector<32x128xf32>
    %45 = tpu.matmul %42, %44, %cst_23 {dimension_numbers = #tpu.dot_dimension_numbers<[1], [0], [0], [1], [0, 0, 1, 1], [], []>} : vector<32x128xbf16>, vector<128x128xbf16>, vector<32x128xf32> -> vector<32x128xf32>
    %46 = arith.addf %40, %45 : vector<32x128xf32>
    %47 = vector.extract_strided_slice %3 {offsets = [2, 1, 0], sizes = [4, 8, 128], strides = [1, 1, 1]} : vector<6x10x128xbf16> to vector<4x8x128xbf16>
    %48 = vector.shape_cast %47 : vector<4x8x128xbf16> to vector<32x128xbf16>
    %c7 = arith.constant 7 : index
    %c0_24 = arith.constant 0 : index
    %c0_25 = arith.constant 0 : index
    %49 = vector.load %arg3[%c7, %c0_24, %c0_25] : memref<9x128x128xbf16, #tpu.memory_space<vmem>>, vector<1x128x128xbf16>
    %50 = vector.shape_cast %49 : vector<1x128x128xbf16> to vector<128x128xbf16>
    %cst_26 = arith.constant dense<0.000000e+00> : vector<32x128xf32>
    %51 = tpu.matmul %48, %50, %cst_26 {dimension_numbers = #tpu.dot_dimension_numbers<[1], [0], [0], [1], [0, 0, 1, 1], [], []>} : vector<32x128xbf16>, vector<128x128xbf16>, vector<32x128xf32> -> vector<32x128xf32>
    %52 = arith.addf %46, %51 : vector<32x128xf32>
    %53 = vector.extract_strided_slice %3 {offsets = [2, 2, 0], sizes = [4, 8, 128], strides = [1, 1, 1]} : vector<6x10x128xbf16> to vector<4x8x128xbf16>
    %54 = vector.shape_cast %53 : vector<4x8x128xbf16> to vector<32x128xbf16>
    %c8 = arith.constant 8 : index
    %c0_27 = arith.constant 0 : index
    %c0_28 = arith.constant 0 : index
    %55 = vector.load %arg3[%c8, %c0_27, %c0_28] : memref<9x128x128xbf16, #tpu.memory_space<vmem>>, vector<1x128x128xbf16>
    %56 = vector.shape_cast %55 : vector<1x128x128xbf16> to vector<128x128xbf16>
    %cst_29 = arith.constant dense<0.000000e+00> : vector<32x128xf32>
    %57 = tpu.matmul %54, %56, %cst_29 {dimension_numbers = #tpu.dot_dimension_numbers<[1], [0], [0], [1], [0, 0, 1, 1], [], []>} : vector<32x128xbf16>, vector<128x128xbf16>, vector<32x128xf32> -> vector<32x128xf32>
    %58 = arith.addf %52, %57 : vector<32x128xf32>
    %c0_30 = arith.constant 0 : index
    %c0_31 = arith.constant 0 : index
    %59 = vector.load %arg4[%c0_30, %c0_31] : memref<1x128xf32, #tpu.memory_space<vmem>>, vector<1x128xf32>
    %60 = vector.broadcast %59 : vector<1x128xf32> to vector<32x128xf32>
    %61 = arith.addf %58, %60 : vector<32x128xf32>
    %c0_32 = arith.constant 0 : index
    %c0_33 = arith.constant 0 : index
    %c0_34 = arith.constant 0 : index
    %c0_35 = arith.constant 0 : index
    %62 = vector.load %arg5[%c0_32, %c0_33, %c0_34, %c0_35] : memref<1x4x8x64xbf16, #tpu.memory_space<vmem>>, vector<1x4x8x64xbf16>
    %63 = vector.shape_cast %62 : vector<1x4x8x64xbf16> to vector<4x8x64xbf16>
    %64 = vector.shape_cast %63 : vector<4x8x64xbf16> to vector<32x64xbf16>
    %c0_36 = arith.constant 0 : index
    %c0_37 = arith.constant 0 : index
    %65 = vector.load %arg6[%c0_36, %c0_37] : memref<64x128xbf16, #tpu.memory_space<vmem>>, vector<64x128xbf16>
    %cst_38 = arith.constant dense<0.000000e+00> : vector<32x128xf32>
    %66 = tpu.matmul %64, %65, %cst_38 {dimension_numbers = #tpu.dot_dimension_numbers<[1], [0], [0], [1], [0, 0, 1, 1], [], []>} : vector<32x64xbf16>, vector<64x128xbf16>, vector<32x128xf32> -> vector<32x128xf32>
    %67 = arith.addf %61, %66 : vector<32x128xf32>
    %cst_39 = arith.constant 0.000000e+00 : f32
    %68 = vector.broadcast %cst_39 : f32 to vector<32x128xf32>
    %69 = arith.maximumf %67, %68 : vector<32x128xf32>
    %70 = vector.shape_cast %69 : vector<32x128xf32> to vector<4x8x128xf32>
    %71 = arith.truncf %70 : vector<4x8x128xf32> to vector<4x8x128xbf16>
    %c0_40 = arith.constant 0 : index
    %c0_41 = arith.constant 0 : index
    %c0_42 = arith.constant 0 : index
    %c0_43 = arith.constant 0 : index
    %72 = vector.load %arg7[%c0_40, %c0_41, %c0_42, %c0_43] : memref<1x4x8x128xbf16, #tpu.memory_space<vmem>>, vector<1x4x8x128xbf16>
    %73 = vector.shape_cast %72 : vector<1x4x8x128xbf16> to vector<4x8x128xbf16>
    %74 = vector.shape_cast %71 : vector<4x8x128xbf16> to vector<1x4x8x128xbf16>
    tpu.vector_store %arg7[%c0_40, %c0_41, %c0_42, %c0_43], %74 {strides = array<i32>} : memref<1x4x8x128xbf16, #tpu.memory_space<vmem>>, vector<1x4x8x128xbf16>,
    return
  }
  func.func @transform_0(%arg0: i32, %arg1: i32) -> (i32, i32, i32, i32) {
    %c0_i32 = arith.constant 0 : i32
    %c0_i32_0 = arith.constant 0 : i32
    %c0_i32_1 = arith.constant 0 : i32
    %c0_i32_2 = arith.constant 0 : i32
    return %arg0, %c0_i32, %c0_i32_0, %c0_i32_1 : i32, i32, i32, i32
  }
  func.func @transform_1(%arg0: i32, %arg1: i32) -> (i32, i32, i32) {
    %c0_i32 = arith.constant 0 : i32
    %c0_i32_0 = arith.constant 0 : i32
    %c0_i32_1 = arith.constant 0 : i32
    %c0_i32_2 = arith.constant 0 : i32
    return %c0_i32, %c0_i32_0, %c0_i32_1 : i32, i32, i32
  }
  func.func @transform_2(%arg0: i32, %arg1: i32) -> (i32, i32) {
    %c0_i32 = arith.constant 0 : i32
    %c0_i32_0 = arith.constant 0 : i32
    %c0_i32_1 = arith.constant 0 : i32
    return %c0_i32, %c0_i32_0 : i32, i32
  }
  func.func @transform_3(%arg0: i32, %arg1: i32) -> (i32, i32, i32, i32) {
    %c0_i32 = arith.constant 0 : i32
    %c0_i32_0 = arith.constant 0 : i32
    %c0_i32_1 = arith.constant 0 : i32
    return %arg0, %arg1, %c0_i32, %c0_i32_0 : i32, i32, i32, i32
  }
  func.func @transform_4(%arg0: i32, %arg1: i32) -> (i32, i32) {
    %c0_i32 = arith.constant 0 : i32
    %c0_i32_0 = arith.constant 0 : i32
    %c0_i32_1 = arith.constant 0 : i32
    return %c0_i32, %c0_i32_0 : i32, i32
  }
  func.func @transform_5(%arg0: i32, %arg1: i32) -> (i32, i32, i32, i32) {
    %c0_i32 = arith.constant 0 : i32
    %c0_i32_0 = arith.constant 0 : i32
    %c0_i32_1 = arith.constant 0 : i32
    return %arg0, %arg1, %c0_i32, %c0_i32_0 : i32, i32, i32, i32
  }
}

</mosaic_0001>

<llo_original>
// kernel: basic_block_forward.2
$region0: #{basic_block_forward.2}
  #allocation0 [shape = 'u32[]', space=smem, size = 0x4, offset = 0x4, fixed_abs, tag = 'smem constant byte address 0x4 - core index']
  #allocation1 [shape = 'u32[144,128]{1,0:T(1,128)}', space=vmem, size = 0x12000, scoped, tag = 'internal scratch']
  %s0 = inlined_call_operand.vmem [shape: bf16[128,640], index: 0, kind: input, shape index: {}]
  %s1 = inlined_call_operand.vmem [shape: bf16[640,128], index: 1, kind: input, shape index: {}]
  %s2 = inlined_call_operand.vmem [shape: f32[1,128], index: 2, kind: input, shape index: {}]
  %s3 = inlined_call_operand.vmem [shape: bf16[128,128], index: 3, kind: output, shape index: {}]
  %s4 = sld [smem:[#allocation0]]
  $region45: #{basic_block_forward.2} parent=0
    _
  %s6 = ssub.s32 1, %s4
  %s7 = scalar_select 0, %s6, %s4
  loop: start=0, step=1, limit=6
  $region2: #{basic_block_forward.2} parent=0 // loop_pre_header
    _
  $region3: #{basic_block_forward.2} parent=0 // loop_header
    %s9 = sphi 0, %s13
    %p10 = scmp.ge.s32.totalorder %s9, 6
    %s19 = sphi 0, %s21
    %s22 = sphi 0, %s19
    %s23 = sphi 0, %s22
    %s39 = sphi 0, %s23
    %s43 = sphi 0, %s43
    %s45 = sphi 0, %s43
    %s46 = sphi 0, %s45
    %s60 = sphi 0, %s46
    %s64 = sphi 0, %s64
    %s66 = sphi 0, %s64
    %s67 = sphi 0, %s66
    %s81 = sphi 0, %s67
    %s87 = sphi 0, %s89
    %s90 = sphi 0, %s87
    %s91 = sphi 0, %s90
    %s107 = sphi 0, %s91
  $region4: #{basic_block_forward.2} parent=0 // loop_header_branch
    %12 = sbr.rel (%p10) target = $region8
  $region5: #{basic_block_forward.2} parent=0 // loop_body
    %s14 = ssub.s32 %s9, 1
    %s15 = ssub.s32 %s9, 2
    %s16 = sadd.s32 %s9, 1
    %s17 = ssub.s32 %s9, %s16
    %p18 = scmp.eq.s32.totalorder %s17, 0
    %s20 = sadd.s32 %s19, 1
    %s21 = scalar_select %p18, %s19, %s20
    %p24 = pneg %p18
    %p25 = scmp.eq.s32.totalorder %s9, 3
    %p26 = por %p24, %p25
    %p27 = scmp.ne.s32.totalorder %s19, %s22
    %p28 = scmp.eq.s32.totalorder %s9, 0
    %p29 = por %p27, %p28
    %p30 = scmp.ne.s32.totalorder %s19, %s22
    %p31 = scmp.eq.s32.totalorder %s14, 3
    %p32 = por %p30, %p31
    %p33 = scmp.ne.s32.totalorder %s22, %s23
    %p34 = scmp.eq.s32.totalorder %s14, 0
    %p35 = por %p33, %p34
    %p36 = scmp.ne.s32.totalorder %s22, %s23
    %p37 = scmp.eq.s32.totalorder %s15, 3
    %p38 = por %p36, %p37
    %p40 = scmp.ne.s32.totalorder %s23, %s39
    %p41 = scmp.eq.s32.totalorder %s15, 0
    %p42 = por %p40, %p41
    %s44 = sadd.s32 %s43, 1
    %p47 = scmp.eq.s32.totalorder %s9, 3
    %p48 = scmp.ne.s32.totalorder %s43, %s45
    %p49 = scmp.eq.s32.totalorder %s9, 0
    %p50 = por %p48, %p49
    %p51 = scmp.ne.s32.totalorder %s43, %s45
    %p52 = scmp.eq.s32.totalorder %s14, 3
    %p53 = por %p51, %p52
    %p54 = scmp.ne.s32.totalorder %s45, %s46
    %p55 = scmp.eq.s32.totalorder %s14, 0
    %p56 = por %p54, %p55
    %p57 = scmp.ne.s32.totalorder %s45, %s46
    %p58 = scmp.eq.s32.totalorder %s15, 3
    %p59 = por %p57, %p58
    %p61 = scmp.ne.s32.totalorder %s46, %s60
    %p62 = scmp.eq.s32.totalorder %s15, 0
    %p63 = por %p61, %p62
    %s65 = sadd.s32 %s64, 1
    %p68 = scmp.eq.s32.totalorder %s9, 3
    %p69 = scmp.ne.s32.totalorder %s64, %s66
    %p70 = scmp.eq.s32.totalorder %s9, 0
    %p71 = por %p69, %p70
    %p72 = scmp.ne.s32.totalorder %s64, %s66
    %p73 = scmp.eq.s32.totalorder %s14, 3
    %p74 = por %p72, %p73
    %p75 = scmp.ne.s32.totalorder %s66, %s67
    %p76 = scmp.eq.s32.totalorder %s14, 0
    %p77 = por %p75, %p76
    %p78 = scmp.ne.s32.totalorder %s66, %s67
    %p79 = scmp.eq.s32.totalorder %s15, 3
    %p80 = por %p78, %p79
    %p82 = scmp.ne.s32.totalorder %s67, %s81
    %p83 = scmp.eq.s32.totalorder %s15, 0
    %p84 = por %p82, %p83
    %s85 = ssub.s32 %s9, %s16
    %p86 = scmp.eq.s32.totalorder %s85, 0
    %s88 = sadd.s32 %s87, 1
    %s89 = scalar_select %p86, %s87, %s88
    %p92 = pneg %p86
    %p93 = scmp.eq.s32.totalorder %s9, 3
    %p94 = por %p92, %p93
    %p95 = scmp.ne.s32.totalorder %s87, %s90
    %p96 = scmp.eq.s32.totalorder %s9, 0
    %p97 = por %p95, %p96
    %p98 = scmp.ne.s32.totalorder %s87, %s90
    %p99 = scmp.eq.s32.totalorder %s14, 3
    %p100 = por %p98, %p99
    %p101 = scmp.ne.s32.totalorder %s90, %s91
    %p102 = scmp.eq.s32.totalorder %s14, 0
    %p103 = por %p101, %p102
    %p104 = scmp.ne.s32.totalorder %s90, %s91
    %p105 = scmp.eq.s32.totalorder %s15, 3
    %p106 = por %p104, %p105
    %p108 = scmp.ne.s32.totalorder %s91, %s107
    %p109 = scmp.eq.s32.totalorder %s15, 0
    %p110 = por %p108, %p109
    %p111 = scmp.le.s32.totalorder 1, %s9
    %p112 = scmp.lt.s32.totalorder %s9, 5
    %p113 = pnand %p111, %p112
    %p114 = pneg %p113
    // Predicated region
    $region9: #{basic_block_forward.2} parent=5 // pred_check
      _
    $region10: #{basic_block_forward.2} parent=5 // pred_check_branch
      %116 = sbr.rel (%p113) target = $region12
    $region11: #{basic_block_forward.2} parent=5 // pred_region
      %s117 = ssub.s32 %s9, 1
      // Predicated region
      $region13: #{basic_block_forward.2} parent=11 // pred_check
        %p118 = pneg %p56
      $region14: #{basic_block_forward.2} parent=11 // pred_check_branch
        %120 = sbr.rel (%p118) target = $region16
      $region15: #{basic_block_forward.2} parent=11 // pred_region
        _
      $region16: #{basic_block_forward.2} parent=11 // pred_fallthru
        _
      // Predicated region
      $region17: #{basic_block_forward.2} parent=11 // pred_check
        %p121 = pneg %p77
      $region18: #{basic_block_forward.2} parent=11 // pred_check_branch
        %123 = sbr.rel (%p121) target = $region20
      $region19: #{basic_block_forward.2} parent=11 // pred_region
        _
      $region20: #{basic_block_forward.2} parent=11 // pred_fallthru
        _
    $region12: #{basic_block_forward.2} parent=5 // pred_fallthru
      _
    %p124 = scmp.lt.s32.totalorder %s9, 4
    // Predicated region
    $region21: #{basic_block_forward.2} parent=5 // pred_check
      %p125 = pneg %p124
    $region22: #{basic_block_forward.2} parent=5 // pred_check_branch
      %127 = sbr.rel (%p125) target = $region24
    $region23: #{basic_block_forward.2} parent=5 // pred_region
      // Predicated region
      $region25: #{basic_block_forward.2} parent=23 // pred_check
        %p128 = pneg %p29
      $region26: #{basic_block_forward.2} parent=23 // pred_check_branch
        %130 = sbr.rel (%p128) target = $region28
      $region27: #{basic_block_forward.2} parent=23 // pred_region
        %s131 = smul.u32 4, %s9
        %p132 = scmp.lt.s32.totalorder %s131, 15
        %s133 = scalar_select %p132, %s131, 15
        %s134 = smul.addr %s133, 5
        %s135 = smul.addr %s134, 4
        %s136 = scalar_lea.vmem %s0, %s135
        %s137 = smul.u32 4, %s9
      $region28: #{basic_block_forward.2} parent=23 // pred_fallthru
        _
    $region24: #{basic_block_forward.2} parent=5 // pred_fallthru
      _
    %p138 = scmp.le.s32.totalorder 1, %s9
    %p139 = scmp.lt.s32.totalorder %s9, 5
    %p140 = pnand %p138, %p139
    %p141 = pneg %p140
    // Predicated region
    $region29: #{basic_block_forward.2} parent=5 // pred_check
      _
    $region30: #{basic_block_forward.2} parent=5 // pred_check_branch
      %143 = sbr.rel (%p140) target = $region32
    $region31: #{basic_block_forward.2} parent=5 // pred_region
      %s144 = ssub.s32 %s9, 1
      %s145 = smul.u32 4, %s14
      %p146 = scmp.lt.s32.totalorder %s145, 15
      %s147 = scalar_select %p146, %s145, 15
      %s148 = smul.addr %s147, 5
      %s149 = smul.addr %s148, 4
      %s150 = scalar_lea.vmem %s0, %s149
      %p151 = pneg %p35
      %p152 = pneg %p32
      %p153 = pneg %p56
      %p154 = pneg %p53
      %p155 = pneg %p77
      %p156 = pneg %p74
      %p157 = pneg %p103
      %p158 = pneg %p100
      %s159 = smul.u32 4, %s14
      %p160 = scmp.lt.s32.totalorder %s159, 15
      %s161 = scalar_select %p160, %s159, 15
      %s162 = smul.addr %s161, 4
      %s163 = scalar_lea.vmem %s3, %s162
      %s164 = smul.u32 4, %s14
      %p165 = scmp.lt.s32.totalorder %s164, 15
      %s166 = scalar_select %p165, %s164, 15
      %s167 = smul.addr %s166, 5
      %s168 = smul.addr %s167, 4
      %s169 = scalar_lea.vmem %s0, %s168
      %s170 = smul.u32 4, %s14
      %s171 = smul.u32 4, %s14
      %p172 = scmp.lt.s32.totalorder %s171, 15
      %s173 = scalar_select %p172, %s171, 15
      %s174 = smul.addr %s173, 4
      %s175 = scalar_lea.vmem %s3, %s174
      %s176 = smul.u32 4, %s14
      %v178 = vld [vmem:[%s169] sm:$0xff]
      %v179 = vld [vmem:[%s169 + $0x8] sm:$0xff]
      %v180 = vld [vmem:[%s169 + $0x10] sm:$0xf]
      %v181 = vld [vmem:[%s169 + $0x14] sm:$0xff]
      %v182 = vld [vmem:[%s169 + $0x1c] sm:$0xff]
      %v183 = vld [vmem:[%s169 + $0x24] sm:$0xf]
      %v184 = vld [vmem:[%s169 + $0x28] sm:$0xff]
      %v185 = vld [vmem:[%s169 + $0x30] sm:$0xff]
      %v186 = vld [vmem:[%s169 + $0x38] sm:$0xf]
      %v187 = vld [vmem:[%s169 + $0x3c] sm:$0xff]
      %v188 = vld [vmem:[%s169 + $0x44] sm:$0xff]
      %v189 = vld [vmem:[%s169 + $0x4c] sm:$0xf]
      %v190 = vld [vmem:[%s1] sm:$0xf]
      %v191 = vld [vmem:[%s1 + $0x4] sm:$0xf]
      %v192 = vld [vmem:[%s1 + $0x8] sm:$0xf]
      %v193 = vld [vmem:[%s1 + $0xc] sm:$0xf]
      %v194 = vld [vmem:[%s1 + $0x10] sm:$0xf]
      %v195 = vld [vmem:[%s1 + $0x14] sm:$0xf]
      %v196 = vld [vmem:[%s1 + $0x18] sm:$0xf]
      %v197 = vld [vmem:[%s1 + $0x1c] sm:$0xf]
      %v198 = vld [vmem:[%s1 + $0x20] sm:$0xf]
      %v199 = vld [vmem:[%s1 + $0x24] sm:$0xf]
      %v200 = vld [vmem:[%s1 + $0x28] sm:$0xf]
      %v201 = vld [vmem:[%s1 + $0x2c] sm:$0xf]
      %v202 = vld [vmem:[%s1 + $0x30] sm:$0xf]
      %v203 = vld [vmem:[%s1 + $0x34] sm:$0xf]
      %v204 = vld [vmem:[%s1 + $0x38] sm:$0xf]
      %v205 = vld [vmem:[%s1 + $0x3c] sm:$0xf]
      %v206 = vld [vmem:[%s1 + $0x40] sm:$0xf]
      %v207 = vld [vmem:[%s1 + $0x44] sm:$0xf]
      %v208 = vld [vmem:[%s1 + $0x48] sm:$0xf]
      %v209 = vld [vmem:[%s1 + $0x4c] sm:$0xf]
      %v210 = vld [vmem:[%s1 + $0x50] sm:$0xf]
      %v211 = vld [vmem:[%s1 + $0x54] sm:$0xf]
      %v212 = vld [vmem:[%s1 + $0x58] sm:$0xf]
      %v213 = vld [vmem:[%s1 + $0x5c] sm:$0xf]
      %v214 = vld [vmem:[%s1 + $0x60] sm:$0xf]
      %v215 = vld [vmem:[%s1 + $0x64] sm:$0xf]
      %v216 = vld [vmem:[%s1 + $0x68] sm:$0xf]
      %v217 = vld [vmem:[%s1 + $0x6c] sm:$0xf]
      %v218 = vld [vmem:[%s1 + $0x70] sm:$0xf]
      %v219 = vld [vmem:[%s1 + $0x74] sm:$0xf]
      %v220 = vld [vmem:[%s1 + $0x78] sm:$0xf]
      %v221 = vld [vmem:[%s1 + $0x7c] sm:$0xf]
      %v222 = vld [vmem:[%s1 + $0x80] sm:$0xf]
      %v223 = vld [vmem:[%s1 + $0x84] sm:$0xf]
      %v224 = vld [vmem:[%s1 + $0x88] sm:$0xf]
      %v225 = vld [vmem:[%s1 + $0x8c] sm:$0xf]
      %v226 = vld [vmem:[%s1 + $0x90] sm:$0xf]
      %v227 = vld [vmem:[%s1 + $0x94] sm:$0xf]
      %v228 = vld [vmem:[%s1 + $0x98] sm:$0xf]
      %v229 = vld [vmem:[%s1 + $0x9c] sm:$0xf]
      %v230 = vld [vmem:[%s1 + $0xa0] sm:$0xf]
      %v231 = vld [vmem:[%s1 + $0xa4] sm:$0xf]
      %v232 = vld [vmem:[%s1 + $0xa8] sm:$0xf]
      %v233 = vld [vmem:[%s1 + $0xac] sm:$0xf]
      %v234 = vld [vmem:[%s1 + $0xb0] sm:$0xf]
      %v235 = vld [vmem:[%s1 + $0xb4] sm:$0xf]
      %v236 = vld [vmem:[%s1 + $0xb8] sm:$0xf]
      %v237 = vld [vmem:[%s1 + $0xbc] sm:$0xf]
      %v238 = vld [vmem:[%s1 + $0xc0] sm:$0xf]
      %v239 = vld [vmem:[%s1 + $0xc4] sm:$0xf]
      %v240 = vld [vmem:[%s1 + $0xc8] sm:$0xf]
      %v241 = vld [vmem:[%s1 + $0xcc] sm:$0xf]
      %v242 = vld [vmem:[%s1 + $0xd0] sm:$0xf]
      %v243 = vld [vmem:[%s1 + $0xd4] sm:$0xf]
      %v244 = vld [vmem:[%s1 + $0xd8] sm:$0xf]
      %v245 = vld [vmem:[%s1 + $0xdc] sm:$0xf]
      %v246 = vld [vmem:[%s1 + $0xe0] sm:$0xf]
      %v247 = vld [vmem:[%s1 + $0xe4] sm:$0xf]
      %v248 = vld [vmem:[%s1 + $0xe8] sm:$0xf]
      %v249 = vld [vmem:[%s1 + $0xec] sm:$0xf]
      %v250 = vld [vmem:[%s1 + $0xf0] sm:$0xf]
      %v251 = vld [vmem:[%s1 + $0xf4] sm:$0xf]
      %v252 = vld [vmem:[%s1 + $0xf8] sm:$0xf]
      %v253 = vld [vmem:[%s1 + $0xfc] sm:$0xf]
      %v254 = vld [vmem:[%s1 + $0x100] sm:$0xf]
      %v255 = vld [vmem:[%s1 + $0x104] sm:$0xf]
      %v256 = vld [vmem:[%s1 + $0x108] sm:$0xf]
      %v257 = vld [vmem:[%s1 + $0x10c] sm:$0xf]
      %v258 = vld [vmem:[%s1 + $0x110] sm:$0xf]
      %v259 = vld [vmem:[%s1 + $0x114] sm:$0xf]
      %v260 = vld [vmem:[%s1 + $0x118] sm:$0xf]
      %v261 = vld [vmem:[%s1 + $0x11c] sm:$0xf]
      %v262 = vld [vmem:[%s1 + $0x120] sm:$0xf]
      %v263 = vld [vmem:[%s1 + $0x124] sm:$0xf]
      %v264 = vld [vmem:[%s1 + $0x128] sm:$0xf]
      %v265 = vld [vmem:[%s1 + $0x12c] sm:$0xf]
      %v266 = vld [vmem:[%s1 + $0x130] sm:$0xf]
      %v267 = vld [vmem:[%s1 + $0x134] sm:$0xf]
      %v268 = vld [vmem:[%s1 + $0x138] sm:$0xf]
      %v269 = vld [vmem:[%s1 + $0x13c] sm:$0xf]
      %v270 = vld [vmem:[%s2] sm:$0x1]
      %v272 = vlaneseq
      %v273 = vshrl.u32 %v272, 7
      %v274 = vsub.s32 0, %v273
      %v275 = vrot.slane %v270, %v274
      %v289 = vunpack.c.l.b16 %v178
      %v290 = vunpack.c.h.b16 %v178
      %v291 = vunpack.c.l.b16 %v179
      %v292 = vunpack.c.h.b16 %v179
      %v293 = vunpack.c.l.b16 %v180
      %v294 = vunpack.c.l.b16 %v181
      %v295 = vunpack.c.h.b16 %v181
      %v296 = vunpack.c.l.b16 %v182
      %v297 = vunpack.c.h.b16 %v182
      %v298 = vunpack.c.l.b16 %v183
      %v299 = vunpack.c.l.b16 %v184
      %v300 = vunpack.c.h.b16 %v184
      %v301 = vunpack.c.l.b16 %v185
      %v302 = vunpack.c.h.b16 %v185
      %v303 = vunpack.c.l.b16 %v186
      %v304 = vunpack.c.l.b16 %v187
      %v305 = vunpack.c.h.b16 %v187
      %v306 = vunpack.c.l.b16 %v188
      %v307 = vunpack.c.h.b16 %v188
      %v308 = vunpack.c.l.b16 %v189
      %v309 = vpack.c.b16 %v294, %v289
      %v310 = vpack.c.b16 %v295, %v290
      %v311 = vpack.c.b16 %v296, %v291
      %v312 = vpack.c.b16 %v297, %v292
      %v313 = vpack.c.b16 %v298, %v293
      %v314 = vpack.c.b16 %v304, %v299
      %v315 = vpack.c.b16 %v305, %v300
      %v316 = vpack.c.b16 %v306, %v301
      %v317 = vpack.c.b16 %v307, %v302
      %v318 = vpack.c.b16 %v308, %v303
      %v409 = vunpack.c.l.b16 %v190
      %v410 = vunpack.c.l.b16 %v191
      %v411 = vunpack.c.l.b16 %v192
      %v412 = vunpack.c.l.b16 %v193
      %v413 = vunpack.c.l.b16 %v194
      %v414 = vunpack.c.l.b16 %v195
      %v415 = vunpack.c.l.b16 %v196
      %v416 = vunpack.c.l.b16 %v197
      %v417 = vunpack.c.l.b16 %v198
      %v418 = vunpack.c.l.b16 %v199
      %v419 = vunpack.c.l.b16 %v200
      %v420 = vunpack.c.l.b16 %v201
      %v421 = vunpack.c.l.b16 %v202
      %v422 = vunpack.c.l.b16 %v203
      %v423 = vunpack.c.l.b16 %v204
      %v424 = vunpack.c.l.b16 %v205
      %v425 = vunpack.c.l.b16 %v206
      %v426 = vunpack.c.l.b16 %v207
      %v427 = vunpack.c.l.b16 %v208
      %v428 = vunpack.c.l.b16 %v209
      %v429 = vunpack.c.l.b16 %v210
      %v430 = vunpack.c.l.b16 %v211
      %v431 = vunpack.c.l.b16 %v212
      %v432 = vunpack.c.l.b16 %v213
      %v433 = vunpack.c.l.b16 %v214
      %v434 = vunpack.c.l.b16 %v215
      %v435 = vunpack.c.l.b16 %v216
      %v436 = vunpack.c.l.b16 %v217
      %v437 = vunpack.c.l.b16 %v218
      %v438 = vunpack.c.l.b16 %v219
      %v439 = vunpack.c.l.b16 %v220
      %v440 = vunpack.c.l.b16 %v221
      %v441 = vunpack.c.l.b16 %v222
      %v442 = vunpack.c.l.b16 %v223
      %v443 = vunpack.c.l.b16 %v224
      %v444 = vunpack.c.l.b16 %v225
      %v445 = vunpack.c.l.b16 %v226
      %v446 = vunpack.c.l.b16 %v227
      %v447 = vunpack.c.l.b16 %v228
      %v448 = vunpack.c.l.b16 %v229
      %v449 = vunpack.c.l.b16 %v230
      %v450 = vunpack.c.l.b16 %v231
      %v451 = vunpack.c.l.b16 %v232
      %v452 = vunpack.c.l.b16 %v233
      %v453 = vunpack.c.l.b16 %v234
      %v454 = vunpack.c.l.b16 %v235
      %v455 = vunpack.c.l.b16 %v236
      %v456 = vunpack.c.l.b16 %v237
      %v457 = vunpack.c.l.b16 %v238
      %v458 = vunpack.c.l.b16 %v239
      %v459 = vunpack.c.l.b16 %v240
      %v460 = vunpack.c.l.b16 %v241
      %v461 = vunpack.c.l.b16 %v242
      %v462 = vunpack.c.l.b16 %v243
      %v463 = vunpack.c.l.b16 %v244
      %v464 = vunpack.c.l.b16 %v245
      %v465 = vunpack.c.l.b16 %v246
      %v466 = vunpack.c.l.b16 %v247
      %v467 = vunpack.c.l.b16 %v248
      %v468 = vunpack.c.l.b16 %v249
      %v469 = vunpack.c.l.b16 %v250
      %v470 = vunpack.c.l.b16 %v251
      %v471 = vunpack.c.l.b16 %v252
      %v472 = vunpack.c.l.b16 %v253
      %v473 = vunpack.c.l.b16 %v254
      %v474 = vunpack.c.l.b16 %v255
      %v475 = vunpack.c.l.b16 %v256
      %v476 = vunpack.c.l.b16 %v257
      %v477 = vunpack.c.l.b16 %v258
      %v478 = vunpack.c.l.b16 %v259
      %v479 = vunpack.c.l.b16 %v260
      %v480 = vunpack.c.l.b16 %v261
      %v481 = vunpack.c.l.b16 %v262
      %v482 = vunpack.c.l.b16 %v263
      %v483 = vunpack.c.l.b16 %v264
      %v484 = vunpack.c.l.b16 %v265
      %v485 = vunpack.c.l.b16 %v266
      %v486 = vunpack.c.l.b16 %v267
      %v487 = vunpack.c.l.b16 %v268
      %v488 = vunpack.c.l.b16 %v269
      %v489 = vpack.c.b16 %v410, %v409
      %v490 = vpack.c.b16 %v412, %v411
      %v491 = vpack.c.b16 %v414, %v413
      %v492 = vpack.c.b16 %v416, %v415
      %v493 = vpack.c.b16 %v418, %v417
      %v494 = vpack.c.b16 %v420, %v419
      %v495 = vpack.c.b16 %v422, %v421
      %v496 = vpack.c.b16 %v424, %v423
      %v497 = vpack.c.b16 %v426, %v425
      %v498 = vpack.c.b16 %v428, %v427
      %v499 = vpack.c.b16 %v430, %v429
      %v500 = vpack.c.b16 %v432, %v431
      %v501 = vpack.c.b16 %v434, %v433
      %v502 = vpack.c.b16 %v436, %v435
      %v503 = vpack.c.b16 %v438, %v437
      %v504 = vpack.c.b16 %v440, %v439
      %v505 = vpack.c.b16 %v442, %v441
      %v506 = vpack.c.b16 %v444, %v443
      %v507 = vpack.c.b16 %v446, %v445
      %v508 = vpack.c.b16 %v448, %v447
      %v509 = vpack.c.b16 %v450, %v449
      %v510 = vpack.c.b16 %v452, %v451
      %v511 = vpack.c.b16 %v454, %v453
      %v512 = vpack.c.b16 %v456, %v455
      %v513 = vpack.c.b16 %v458, %v457
      %v514 = vpack.c.b16 %v460, %v459
      %v515 = vpack.c.b16 %v462, %v461
      %v516 = vpack.c.b16 %v464, %v463
      %v517 = vpack.c.b16 %v466, %v465
      %v518 = vpack.c.b16 %v468, %v467
      %v519 = vpack.c.b16 %v470, %v469
      %v520 = vpack.c.b16 %v472, %v471
      %v521 = vpack.c.b16 %v474, %v473
      %v522 = vpack.c.b16 %v476, %v475
      %v523 = vpack.c.b16 %v478, %v477
      %v524 = vpack.c.b16 %v480, %v479
      %v525 = vpack.c.b16 %v482, %v481
      %v526 = vpack.c.b16 %v484, %v483
      %v527 = vpack.c.b16 %v486, %v485
      %v528 = vpack.c.b16 %v488, %v487
      %569 = vmatprep.subr.bf16.mxu0 0
      %570 = vmatpush1.bf16.msra.mxu0 %v489
      %571 = vmatprep.subr.bf16.mxu0 0
      %572 = vmatpush1.bf16.msra.mxu0 %v490
      %573 = vmatprep.subr.bf16.mxu0 0
      %574 = vmatpush1.bf16.msra.mxu0 %v491
      %575 = vmatprep.subr.bf16.mxu0 0
      %576 = vmatpush1.bf16.msra.mxu0 %v492
      %577 = vmatprep.subr.bf16.mxu0 0
      %578 = vmatpush1.bf16.msra.mxu0 %v493
      %579 = vmatprep.subr.bf16.mxu0 0
      %580 = vmatpush1.bf16.msra.mxu0 %v494
      %581 = vmatprep.subr.bf16.mxu0 0
      %582 = vmatpush1.bf16.msra.mxu0 %v495
      %583 = vmatprep.subr.bf16.mxu0 0
      %584 = vmatpush1.bf16.msra.mxu0 %v496
      %585 = vmatprep.subr.bf16.mxu0 0
      %586 = vmatpush1.bf16.msra.mxu0 %v497
      %587 = vmatprep.subr.bf16.mxu0 0
      %588 = vmatpush1.bf16.msra.mxu0 %v498
      %589 = vmatprep.subr.bf16.mxu0 0
      %590 = vmatpush1.bf16.msra.mxu0 %v499
      %591 = vmatprep.subr.bf16.mxu0 0
      %592 = vmatpush1.bf16.msra.mxu0 %v500
      %593 = vmatprep.subr.bf16.mxu0 0
      %594 = vmatpush1.bf16.msra.mxu0 %v501
      %595 = vmatprep.subr.bf16.mxu0 0
      %596 = vmatpush1.bf16.msra.mxu0 %v502
      %597 = vmatprep.subr.bf16.mxu0 0
      %598 = vmatpush1.bf16.msra.mxu0 %v503
      %599 = vmatprep.subr.bf16.mxu0 0
      %600 = vmatpush1.bf16.msra.mxu0 %v504
      %601 = vmatprep.mubr.bf16.mxu0 %v310
      %602 = vmatmul.mubr.bf16.gmra.mrb[0].mxu0 %v309
      %v603 = vpop.f32.mrb[0].mxu0
      %v604 = vadd.f32 %v275, %v603
      %v605 = vpop.f32.mrb[0].mxu0
      %v606 = vpop.f32.mrb[0].mxu0
      %v607 = vadd.f32 %v275, %v606
      %v608 = vpop.f32.mrb[0].mxu0
      %609 = vmatprep.mubr.bf16.mxu0 %v315
      %610 = vmatmul.mubr.bf16.gmra.mrb[0].mxu0 %v314
      %v611 = vpop.f32.mrb[0].mxu0
      %v612 = vadd.f32 %v275, %v611
      %v613 = vpop.f32.mrb[0].mxu0
      %v614 = vpop.f32.mrb[0].mxu0
      %v615 = vadd.f32 %v275, %v614
      %v616 = vpop.f32.mrb[0].mxu0
      %617 = vdwg.mxu0
      %618 = vmatprep.subr.bf16.mxu0 0
      %619 = vmatpush1.bf16.msra.mxu0 %v505
      %620 = vmatprep.subr.bf16.mxu0 0
      %621 = vmatpush1.bf16.msra.mxu0 %v506
      %622 = vmatprep.subr.bf16.mxu0 0
      %623 = vmatpush1.bf16.msra.mxu0 %v507
      %624 = vmatprep.subr.bf16.mxu0 0
      %625 = vmatpush1.bf16.msra.mxu0 %v508
      %626 = vmatprep.subr.bf16.mxu0 0
      %627 = vmatpush1.bf16.msra.mxu0 %v509
      %628 = vmatprep.subr.bf16.mxu0 0
      %629 = vmatpush1.bf16.msra.mxu0 %v510
      %630 = vmatprep.subr.bf16.mxu0 0
      %631 = vmatpush1.bf16.msra.mxu0 %v511
      %632 = vmatprep.subr.bf16.mxu0 0
      %633 = vmatpush1.bf16.msra.mxu0 %v512
      %634 = vmatprep.subr.bf16.mxu0 0
      %635 = vmatpush1.bf16.msra.mxu0 %v513
      %636 = vmatprep.subr.bf16.mxu0 0
      %637 = vmatpush1.bf16.msra.mxu0 %v514
      %638 = vmatprep.subr.bf16.mxu0 0
      %639 = vmatpush1.bf16.msra.mxu0 %v515
      %640 = vmatprep.subr.bf16.mxu0 0
      %641 = vmatpush1.bf16.msra.mxu0 %v516
      %642 = vmatprep.subr.bf16.mxu0 0
      %643 = vmatpush1.bf16.msra.mxu0 %v517
      %644 = vmatprep.subr.bf16.mxu0 0
      %645 = vmatpush1.bf16.msra.mxu0 %v518
      %646 = vmatprep.subr.bf16.mxu0 0
      %647 = vmatpush1.bf16.msra.mxu0 %v519
      %648 = vmatprep.subr.bf16.mxu0 0
      %649 = vmatpush1.bf16.msra.mxu0 %v520
      %650 = vmatprep.mubr.bf16.mxu0 %v312
      %651 = vmatmul.mubr.bf16.gmra.mrb[0].mxu0 %v311
      %v652 = vpop.f32.mrb[0].mxu0
      %v653 = vadd.f32 %v604, %v652
      %v654 = vpop.f32.mrb[0].mxu0
      %v655 = vpop.f32.mrb[0].mxu0
      %v656 = vadd.f32 %v607, %v655
      %v657 = vpop.f32.mrb[0].mxu0
      %658 = vmatprep.mubr.bf16.mxu0 %v317
      %659 = vmatmul.mubr.bf16.gmra.mrb[0].mxu0 %v316
      %v660 = vpop.f32.mrb[0].mxu0
      %v661 = vadd.f32 %v612, %v660
      %v662 = vpop.f32.mrb[0].mxu0
      %v663 = vpop.f32.mrb[0].mxu0
      %v664 = vadd.f32 %v615, %v663
      %v665 = vpop.f32.mrb[0].mxu0
      %666 = vdwg.mxu0
      %667 = vmatprep.subr.bf16.mxu0 0
      %668 = vmatpush1.bf16.msra.mxu0 %v521
      %669 = vmatprep.subr.bf16.mxu0 0
      %670 = vmatpush1.bf16.msra.mxu0 %v522
      %671 = vmatprep.subr.bf16.mxu0 0
      %672 = vmatpush1.bf16.msra.mxu0 %v523
      %673 = vmatprep.subr.bf16.mxu0 0
      %674 = vmatpush1.bf16.msra.mxu0 %v524
      %675 = vmatprep.subr.bf16.mxu0 0
      %676 = vmatpush1.bf16.msra.mxu0 %v525
      %677 = vmatprep.subr.bf16.mxu0 0
      %678 = vmatpush1.bf16.msra.mxu0 %v526
      %679 = vmatprep.subr.bf16.mxu0 0
      %680 = vmatpush1.bf16.msra.mxu0 %v527
      %681 = vmatprep.subr.bf16.mxu0 0
      %682 = vmatpush1.bf16.msra.mxu0 %v528
      %683 = vmatprep.subr.bf16.mxu0 0
      %684 = vmatpush1.bf16.msra.mxu0 0
      %685 = vmatprep.subr.bf16.mxu0 0
      %686 = vmatpush1.bf16.msra.mxu0 0
      %687 = vmatprep.subr.bf16.mxu0 0
      %688 = vmatpush1.bf16.msra.mxu0 0
      %689 = vmatprep.subr.bf16.mxu0 0
      %690 = vmatpush1.bf16.msra.mxu0 0
      %691 = vmatprep.subr.bf16.mxu0 0
      %692 = vmatpush1.bf16.msra.mxu0 0
      %693 = vmatprep.subr.bf16.mxu0 0
      %694 = vmatpush1.bf16.msra.mxu0 0
      %695 = vmatprep.subr.bf16.mxu0 0
      %696 = vmatpush1.bf16.msra.mxu0 0
      %697 = vmatprep.subr.bf16.mxu0 0
      %698 = vmatpush1.bf16.msra.mxu0 0
      %699 = vmatprep.mubr.bf16.mxu0 0
      %700 = vmatmul.mubr.bf16.gmra.mrb[0].mxu0 %v313
      %v701 = vpop.f32.mrb[0].mxu0
      %v702 = vadd.f32 %v653, %v701
      %v703 = vpop.f32.mrb[0].mxu0
      %v704 = vpop.f32.mrb[0].mxu0
      %v705 = vadd.f32 %v656, %v704
      %v706 = vpop.f32.mrb[0].mxu0
      %707 = vmatprep.mubr.bf16.mxu0 0
      %708 = vmatmul.mubr.bf16.gmra.mrb[0].mxu0 %v318
      %v709 = vpop.f32.mrb[0].mxu0
      %v710 = vadd.f32 %v661, %v709
      %v711 = vpop.f32.mrb[0].mxu0
      %v712 = vpop.f32.mrb[0].mxu0
      %v713 = vadd.f32 %v664, %v712
      %v714 = vpop.f32.mrb[0].mxu0
      %715 = vdwg.mxu0
      %v716 = vmax.f32 %v702, 0.0
      %v717 = vmax.f32 %v705, 0.0
      %v718 = vmax.f32 %v710, 0.0
      %v719 = vmax.f32 %v713, 0.0
      %v720 = vpack.c.bf16 %v717, %v716
      %v721 = vpack.c.bf16 %v719, %v718
      %v724 = vunpack.c.l.b16 %v720
      %v725 = vunpack.c.h.b16 %v720
      %v726 = vunpack.c.l.b16 %v721
      %v727 = vunpack.c.h.b16 %v721
      %v728 = vpack.c.b16 %v724, %v724
      %v729 = vpack.c.b16 %v725, %v725
      %v730 = vpack.c.b16 %v726, %v726
      %v731 = vpack.c.b16 %v727, %v727
      %736 = vst [vmem:[%s175] sm:$0xf] %v728
      %737 = vst [vmem:[%s175 + $0x4] sm:$0xf] %v729
      %738 = vst [vmem:[%s175 + $0x8] sm:$0xf] %v730
      %739 = vst [vmem:[%s175 + $0xc] sm:$0xf] %v731
      %s740 = smul.u32 4, %s14
      %p741 = scmp.lt.s32.totalorder %s740, 15
      %s742 = scalar_select %p741, %s740, 15
      %s743 = smul.addr %s742, 4
      %s744 = scalar_lea.vmem %s3, %s743
      // Predicated region
      $region33: #{basic_block_forward.2} parent=31 // pred_check
        %p745 = pneg %p100
      $region34: #{basic_block_forward.2} parent=31 // pred_check_branch
        %747 = sbr.rel (%p745) target = $region36
      $region35: #{basic_block_forward.2} parent=31 // pred_region
        %s748 = smul.u32 4, %s14
      $region36: #{basic_block_forward.2} parent=31 // pred_fallthru
        _
    $region32: #{basic_block_forward.2} parent=5 // pred_fallthru
      _
    %p749 = scmp.le.s32.totalorder 2, %s9
    // Predicated region
    $region37: #{basic_block_forward.2} parent=5 // pred_check
      %p750 = pneg %p749
    $region38: #{basic_block_forward.2} parent=5 // pred_check_branch
      %752 = sbr.rel (%p750) target = $region40
    $region39: #{basic_block_forward.2} parent=5 // pred_region
      %s753 = ssub.s32 %s9, 2
      // Predicated region
      $region41: #{basic_block_forward.2} parent=39 // pred_check
        %p754 = pneg %p106
      $region42: #{basic_block_forward.2} parent=39 // pred_check_branch
        %756 = sbr.rel (%p754) target = $region44
      $region43: #{basic_block_forward.2} parent=39 // pred_region
        %s757 = smul.u32 4, %s15
        %p758 = scmp.lt.s32.totalorder %s757, 15
        %s759 = scalar_select %p758, %s757, 15
        %s760 = smul.addr %s759, 4
        %s761 = scalar_lea.vmem %s3, %s760
      $region44: #{basic_block_forward.2} parent=39 // pred_fallthru
        _
    $region40: #{basic_block_forward.2} parent=5 // pred_fallthru
      _
  $region6: #{basic_block_forward.2} parent=0 // loop_footer
    %s13 = sadd.s32 1, %s9
  $region7: #{basic_block_forward.2} parent=0 // loop_footer_branch
    %8 = sbr.rel target = $region3
  $region8: #{basic_block_forward.2} parent=0 // loop_exit
    _

// kernel: basic_block_forward.3
$region0: #{basic_block_forward.3}
  #allocation0 [shape = 'u32[]', space=smem, size = 0x4, offset = 0x4, fixed_abs, tag = 'smem constant byte address 0x4 - core index']
  #allocation1 [shape = 'u32[144,128]{1,0:T(1,128)}', space=vmem, size = 0x12000, scoped, tag = 'internal scratch']
  %s0 = inlined_call_operand.vmem [shape: bf16[2,10,10,128], index: 0, kind: input, shape index: {}]
  %s1 = inlined_call_operand.vmem [shape: bf16[9,128,128], index: 1, kind: input, shape index: {}]
  %s2 = inlined_call_operand.vmem [shape: f32[1,128], index: 2, kind: input, shape index: {}]
  %s3 = inlined_call_operand.vmem [shape: bf16[2,8,8,64], index: 3, kind: input, shape index: {}]
  %s4 = inlined_call_operand.vmem [shape: bf16[64,128], index: 4, kind: input, shape index: {}]
  %s5 = inlined_call_operand.vmem [shape: bf16[2,8,8,128], index: 5, kind: output, shape index: {}]
  %s6 = sld [smem:[#allocation0]]
  $region53: #{basic_block_forward.3} parent=0
    _
  %s8 = ssub.s32 1, %s6
  %s9 = scalar_select 0, %s8, %s6
  loop: start=0, step=1, limit=6
  $region2: #{basic_block_forward.3} parent=0 // loop_pre_header
    _
  $region3: #{basic_block_forward.3} parent=0 // loop_header
    %s11 = sphi 0, %s15
    %p12 = scmp.ge.s32.totalorder %s11, 6
    %s18 = sphi 0, %s30
    %s19 = sphi 0, %s26
    %s20 = sphi 0, %s18
    %s21 = sphi 0, %s19
    %s22 = sphi 0, %s20
    %s23 = sphi 0, %s21
    %s33 = sphi 0, %s35
    %s36 = sphi 0, %s33
    %s37 = sphi 0, %s36
    %s53 = sphi 0, %s37
    %s57 = sphi 0, %s57
    %s59 = sphi 0, %s57
    %s60 = sphi 0, %s59
    %s74 = sphi 0, %s60
    %s78 = sphi 0, %s78
    %s80 = sphi 0, %s78
    %s81 = sphi 0, %s80
    %s95 = sphi 0, %s81
    %s103 = sphi 0, %s105
    %s106 = sphi 0, %s103
    %s107 = sphi 0, %s106
    %s123 = sphi 0, %s107
    %s127 = sphi 0, %s127
    %s129 = sphi 0, %s127
    %s130 = sphi 0, %s129
    %s144 = sphi 0, %s130
    %s152 = sphi 0, %s154
    %s155 = sphi 0, %s152
    %s156 = sphi 0, %s155
    %s172 = sphi 0, %s156
  $region4: #{basic_block_forward.3} parent=0 // loop_header_branch
    %14 = sbr.rel (%p12) target = $region8
  $region5: #{basic_block_forward.3} parent=0 // loop_body
    %s16 = ssub.s32 %s11, 1
    %s17 = ssub.s32 %s11, 2
    %s24 = sadd.s32 1, %s19
    %p25 = scmp.ge.s32.totalorder %s24, 2
    %s26 = scalar_select %p25, 0, %s24
    %s27 = sadd.s32 1, %s18
    %s28 = scalar_select %p25, %s27, %s18
    %p29 = scmp.ge.s32.totalorder %s28, 2
    %s30 = scalar_select %p29, 0, %s28
    %s31 = ssub.s32 %s18, %s30
    %p32 = scmp.eq.s32.totalorder %s31, 0
    %s34 = sadd.s32 %s33, 1
    %s35 = scalar_select %p32, %s33, %s34
    %p38 = pneg %p32
    %p39 = scmp.eq.s32.totalorder %s11, 3
    %p40 = por %p38, %p39
    %p41 = scmp.ne.s32.totalorder %s33, %s36
    %p42 = scmp.eq.s32.totalorder %s11, 0
    %p43 = por %p41, %p42
    %p44 = scmp.ne.s32.totalorder %s33, %s36
    %p45 = scmp.eq.s32.totalorder %s16, 3
    %p46 = por %p44, %p45
    %p47 = scmp.ne.s32.totalorder %s36, %s37
    %p48 = scmp.eq.s32.totalorder %s16, 0
    %p49 = por %p47, %p48
    %p50 = scmp.ne.s32.totalorder %s36, %s37
    %p51 = scmp.eq.s32.totalorder %s17, 3
    %p52 = por %p50, %p51
    %p54 = scmp.ne.s32.totalorder %s37, %s53
    %p55 = scmp.eq.s32.totalorder %s17, 0
    %p56 = por %p54, %p55
    %s58 = sadd.s32 %s57, 1
    %p61 = scmp.eq.s32.totalorder %s11, 3
    %p62 = scmp.ne.s32.totalorder %s57, %s59
    %p63 = scmp.eq.s32.totalorder %s11, 0
    %p64 = por %p62, %p63
    %p65 = scmp.ne.s32.totalorder %s57, %s59
    %p66 = scmp.eq.s32.totalorder %s16, 3
    %p67 = por %p65, %p66
    %p68 = scmp.ne.s32.totalorder %s59, %s60
    %p69 = scmp.eq.s32.totalorder %s16, 0
    %p70 = por %p68, %p69
    %p71 = scmp.ne.s32.totalorder %s59, %s60
    %p72 = scmp.eq.s32.totalorder %s17, 3
    %p73 = por %p71, %p72
    %p75 = scmp.ne.s32.totalorder %s60, %s74
    %p76 = scmp.eq.s32.totalorder %s17, 0
    %p77 = por %p75, %p76
    %s79 = sadd.s32 %s78, 1
    %p82 = scmp.eq.s32.totalorder %s11, 3
    %p83 = scmp.ne.s32.totalorder %s78, %s80
    %p84 = scmp.eq.s32.totalorder %s11, 0
    %p85 = por %p83, %p84
    %p86 = scmp.ne.s32.totalorder %s78, %s80
    %p87 = scmp.eq.s32.totalorder %s16, 3
    %p88 = por %p86, %p87
    %p89 = scmp.ne.s32.totalorder %s80, %s81
    %p90 = scmp.eq.s32.totalorder %s16, 0
    %p91 = por %p89, %p90
    %p92 = scmp.ne.s32.totalorder %s80, %s81
    %p93 = scmp.eq.s32.totalorder %s17, 3
    %p94 = por %p92, %p93
    %p96 = scmp.ne.s32.totalorder %s81, %s95
    %p97 = scmp.eq.s32.totalorder %s17, 0
    %p98 = por %p96, %p97
    %s99 = ssub.s32 %s18, %s30
    %s100 = ssub.s32 %s19, %s26
    %s101 = sor.u32 %s99, %s100
    %p102 = scmp.eq.s32.totalorder %s101, 0
    %s104 = sadd.s32 %s103, 1
    %s105 = scalar_select %p102, %s103, %s104
    %p108 = pneg %p102
    %p109 = scmp.eq.s32.totalorder %s11, 3
    %p110 = por %p108, %p109
    %p111 = scmp.ne.s32.totalorder %s103, %s106
    %p112 = scmp.eq.s32.totalorder %s11, 0
    %p113 = por %p111, %p112
    %p114 = scmp.ne.s32.totalorder %s103, %s106
    %p115 = scmp.eq.s32.totalorder %s16, 3
    %p116 = por %p114, %p115
    %p117 = scmp.ne.s32.totalorder %s106, %s107
    %p118 = scmp.eq.s32.totalorder %s16, 0
    %p119 = por %p117, %p118
    %p120 = scmp.ne.s32.totalorder %s106, %s107
    %p121 = scmp.eq.s32.totalorder %s17, 3
    %p122 = por %p120, %p121
    %p124 = scmp.ne.s32.totalorder %s107, %s123
    %p125 = scmp.eq.s32.totalorder %s17, 0
    %p126 = por %p124, %p125
    %s128 = sadd.s32 %s127, 1
    %p131 = scmp.eq.s32.totalorder %s11, 3
    %p132 = scmp.ne.s32.totalorder %s127, %s129
    %p133 = scmp.eq.s32.totalorder %s11, 0
    %p134 = por %p132, %p133
    %p135 = scmp.ne.s32.totalorder %s127, %s129
    %p136 = scmp.eq.s32.totalorder %s16, 3
    %p137 = por %p135, %p136
    %p138 = scmp.ne.s32.totalorder %s129, %s130
    %p139 = scmp.eq.s32.totalorder %s16, 0
    %p140 = por %p138, %p139
    %p141 = scmp.ne.s32.totalorder %s129, %s130
    %p142 = scmp.eq.s32.totalorder %s17, 3
    %p143 = por %p141, %p142
    %p145 = scmp.ne.s32.totalorder %s130, %s144
    %p146 = scmp.eq.s32.totalorder %s17, 0
    %p147 = por %p145, %p146
    %s148 = ssub.s32 %s18, %s30
    %s149 = ssub.s32 %s19, %s26
    %s150 = sor.u32 %s148, %s149
    %p151 = scmp.eq.s32.totalorder %s150, 0
    %s153 = sadd.s32 %s152, 1
    %s154 = scalar_select %p151, %s152, %s153
    %p157 = pneg %p151
    %p158 = scmp.eq.s32.totalorder %s11, 3
    %p159 = por %p157, %p158
    %p160 = scmp.ne.s32.totalorder %s152, %s155
    %p161 = scmp.eq.s32.totalorder %s11, 0
    %p162 = por %p160, %p161
    %p163 = scmp.ne.s32.totalorder %s152, %s155
    %p164 = scmp.eq.s32.totalorder %s16, 3
    %p165 = por %p163, %p164
    %p166 = scmp.ne.s32.totalorder %s155, %s156
    %p167 = scmp.eq.s32.totalorder %s16, 0
    %p168 = por %p166, %p167
    %p169 = scmp.ne.s32.totalorder %s155, %s156
    %p170 = scmp.eq.s32.totalorder %s17, 3
    %p171 = por %p169, %p170
    %p173 = scmp.ne.s32.totalorder %s156, %s172
    %p174 = scmp.eq.s32.totalorder %s17, 0
    %p175 = por %p173, %p174
    %p176 = scmp.le.s32.totalorder 1, %s11
    %p177 = scmp.lt.s32.totalorder %s11, 5
    %p178 = pnand %p176, %p177
    %p179 = pneg %p178
    // Predicated region
    $region9: #{basic_block_forward.3} parent=5 // pred_check
      _
    $region10: #{basic_block_forward.3} parent=5 // pred_check_branch
      %181 = sbr.rel (%p178) target = $region12
    $region11: #{basic_block_forward.3} parent=5 // pred_region
      %s182 = ssub.s32 %s11, 1
      // Predicated region
      $region13: #{basic_block_forward.3} parent=11 // pred_check
        %p183 = pneg %p70
      $region14: #{basic_block_forward.3} parent=11 // pred_check_branch
        %185 = sbr.rel (%p183) target = $region16
      $region15: #{basic_block_forward.3} parent=11 // pred_region
        _
      $region16: #{basic_block_forward.3} parent=11 // pred_fallthru
        _
      // Predicated region
      $region17: #{basic_block_forward.3} parent=11 // pred_check
        %p186 = pneg %p91
      $region18: #{basic_block_forward.3} parent=11 // pred_check_branch
        %188 = sbr.rel (%p186) target = $region20
      $region19: #{basic_block_forward.3} parent=11 // pred_region
        _
      $region20: #{basic_block_forward.3} parent=11 // pred_fallthru
        _
      // Predicated region
      $region21: #{basic_block_forward.3} parent=11 // pred_check
        %p189 = pneg %p140
      $region22: #{basic_block_forward.3} parent=11 // pred_check_branch
        %191 = sbr.rel (%p189) target = $region24
      $region23: #{basic_block_forward.3} parent=11 // pred_region
        _
      $region24: #{basic_block_forward.3} parent=11 // pred_fallthru
        _
    $region12: #{basic_block_forward.3} parent=5 // pred_fallthru
      _
    %p192 = scmp.lt.s32.totalorder %s11, 4
    // Predicated region
    $region25: #{basic_block_forward.3} parent=5 // pred_check
      %p193 = pneg %p192
    $region26: #{basic_block_forward.3} parent=5 // pred_check_branch
      %195 = sbr.rel (%p193) target = $region28
    $region27: #{basic_block_forward.3} parent=5 // pred_region
      // Predicated region
      $region29: #{basic_block_forward.3} parent=27 // pred_check
        %p196 = pneg %p43
      $region30: #{basic_block_forward.3} parent=27 // pred_check_branch
        %198 = sbr.rel (%p196) target = $region32
      $region31: #{basic_block_forward.3} parent=27 // pred_region
        %p199 = scmp.lt.s32.totalorder %s18, 1
        %s200 = scalar_select %p199, %s18, 1
        %s201 = smul.addr %s200, 20
        %s202 = smul.addr %s201, 4
        %s203 = scalar_lea.vmem %s0, %s202
      $region32: #{basic_block_forward.3} parent=27 // pred_fallthru
        _
      // Predicated region
      $region33: #{basic_block_forward.3} parent=27 // pred_check
        %p204 = pneg %p113
      $region34: #{basic_block_forward.3} parent=27 // pred_check_branch
        %206 = sbr.rel (%p204) target = $region36
      $region35: #{basic_block_forward.3} parent=27 // pred_region
        %s207 = smul.u32 4, %s19
        %p208 = scmp.lt.s32.totalorder %s18, 1
        %s209 = scalar_select %p208, %s18, 1
        %p210 = scmp.lt.s32.totalorder %s207, 7
        %s211 = scalar_select %p210, %s207, 7
        %s212 = smul.addr %s209, 8
        %s213 = sadd.s32 %s211, %s212
        %s214 = smul.addr %s213, 4
        %s215 = scalar_lea.vmem %s3, %s214
        %s216 = smul.u32 4, %s19
      $region36: #{basic_block_forward.3} parent=27 // pred_fallthru
        _
    $region28: #{basic_block_forward.3} parent=5 // pred_fallthru
      _
    %p217 = scmp.le.s32.totalorder 1, %s11
    %p218 = scmp.lt.s32.totalorder %s11, 5
    %p219 = pnand %p217, %p218
    %p220 = pneg %p219
    // Predicated region
    $region37: #{basic_block_forward.3} parent=5 // pred_check
      _
    $region38: #{basic_block_forward.3} parent=5 // pred_check_branch
      %222 = sbr.rel (%p219) target = $region40
    $region39: #{basic_block_forward.3} parent=5 // pred_region
      %s223 = ssub.s32 %s11, 1
      %p224 = scmp.lt.s32.totalorder %s20, 1
      %s225 = scalar_select %p224, %s20, 1
      %s226 = smul.addr %s225, 20
      %s227 = smul.addr %s226, 4
      %s228 = scalar_lea.vmem %s0, %s227
      %p229 = pneg %p49
      %p230 = pneg %p46
      %p231 = pneg %p70
      %p232 = pneg %p67
      %p233 = pneg %p91
      %p234 = pneg %p88
      %s235 = smul.u32 4, %s21
      %p236 = scmp.lt.s32.totalorder %s20, 1
      %s237 = scalar_select %p236, %s20, 1
      %p238 = scmp.lt.s32.totalorder %s235, 7
      %s239 = scalar_select %p238, %s235, 7
      %s240 = smul.addr %s237, 8
      %s241 = sadd.s32 %s239, %s240
      %s242 = smul.addr %s241, 4
      %s243 = scalar_lea.vmem %s3, %s242
      %p244 = pneg %p119
      %p245 = pneg %p116
      %p246 = pneg %p140
      %p247 = pneg %p137
      %p248 = pneg %p168
      %p249 = pneg %p165
      %s250 = smul.u32 4, %s21
      %p251 = scmp.lt.s32.totalorder %s20, 1
      %s252 = scalar_select %p251, %s20, 1
      %p253 = scmp.lt.s32.totalorder %s250, 7
      %s254 = scalar_select %p253, %s250, 7
      %s255 = smul.addr %s252, 8
      %s256 = sadd.s32 %s254, %s255
      %s257 = smul.addr %s256, 4
      %s258 = scalar_lea.vmem %s5, %s257
      %p259 = scmp.lt.s32.totalorder %s20, 1
      %s260 = scalar_select %p259, %s20, 1
      %s261 = smul.addr %s260, 20
      %s262 = smul.addr %s261, 4
      %s263 = scalar_lea.vmem %s0, %s262
      %s264 = smul.u32 4, %s21
      %p265 = scmp.lt.s32.totalorder %s20, 1
      %s266 = scalar_select %p265, %s20, 1
      %p267 = scmp.lt.s32.totalorder %s264, 7
      %s268 = scalar_select %p267, %s264, 7
      %s269 = smul.addr %s266, 8
      %s270 = sadd.s32 %s268, %s269
      %s271 = smul.addr %s270, 4
      %s272 = scalar_lea.vmem %s3, %s271
      %s273 = smul.u32 4, %s21
      %s274 = smul.u32 4, %s21
      %p275 = scmp.lt.s32.totalorder %s20, 1
      %s276 = scalar_select %p275, %s20, 1
      %p277 = scmp.lt.s32.totalorder %s274, 7
      %s278 = scalar_select %p277, %s274, 7
      %s279 = smul.addr %s276, 8
      %s280 = sadd.s32 %s278, %s279
      %s281 = smul.addr %s280, 4
      %s282 = scalar_lea.vmem %s5, %s281
      %s283 = smul.u32 4, %s21
      %s285 = smul.u32 %s21, 4
      %s286 = smul.u32 %s285, 2
      %s287 = smul.addr %s286, 4
      %s288 = scalar_lea.vmem %s263, %s287
      %v289 = vld [vmem:[%s288] sm:$0xf]
      %v290 = vld [vmem:[%s288 + $0x4] sm:$0x1]
      %v291 = vld [vmem:[%s288 + $0x8] sm:$0xf]
      %v292 = vld [vmem:[%s288 + $0xc] sm:$0x1]
      %v293 = vld [vmem:[%s288 + $0x10] sm:$0xf]
      %v294 = vld [vmem:[%s288 + $0x14] sm:$0x1]
      %v295 = vld [vmem:[%s288 + $0x18] sm:$0xf]
      %v296 = vld [vmem:[%s288 + $0x1c] sm:$0x1]
      %v297 = vld [vmem:[%s288 + $0x20] sm:$0xf]
      %v298 = vld [vmem:[%s288 + $0x24] sm:$0x1]
      %v299 = vld [vmem:[%s288 + $0x28] sm:$0xf]
      %v300 = vld [vmem:[%s288 + $0x2c] sm:$0x1]
      %v301 = vld [vmem:[%s1] sm:$0xf]
      %v302 = vld [vmem:[%s1 + $0x4] sm:$0xf]
      %v303 = vld [vmem:[%s1 + $0x8] sm:$0xf]
      %v304 = vld [vmem:[%s1 + $0xc] sm:$0xf]
      %v305 = vld [vmem:[%s1 + $0x10] sm:$0xf]
      %v306 = vld [vmem:[%s1 + $0x14] sm:$0xf]
      %v307 = vld [vmem:[%s1 + $0x18] sm:$0xf]
      %v308 = vld [vmem:[%s1 + $0x1c] sm:$0xf]
      %v309 = vld [vmem:[%s1 + $0x20] sm:$0xf]
      %v310 = vld [vmem:[%s1 + $0x24] sm:$0xf]
      %v311 = vld [vmem:[%s1 + $0x28] sm:$0xf]
      %v312 = vld [vmem:[%s1 + $0x2c] sm:$0xf]
      %v313 = vld [vmem:[%s1 + $0x30] sm:$0xf]
      %v314 = vld [vmem:[%s1 + $0x34] sm:$0xf]
      %v315 = vld [vmem:[%s1 + $0x38] sm:$0xf]
      %v316 = vld [vmem:[%s1 + $0x3c] sm:$0xf]
      %vm317 = vsmask.f32 3328
      %vm318 = vsmask.f32 7440
      %vm319 = vmor %vm317, %vm318
      %v321 = vshrl.u32 %v289, 16
      %v323 = vrot.slane %v321, 4
      %v324 = vshll.u32 %v289, 16
      %v326 = vrot.slane %v324, 5
      %v327 = vor.u32 %v323, %v326
      %v328 = vrot.slane %v327, 4
      %v330 = vshll.u32 %v290, 16
      %v332 = vrot.slane %v330, 5
      %v333 = vsel %vm319, %v328, %v332
      %v335 = vshrl.u32 %v291, 16
      %v337 = vrot.slane %v335, 4
      %v338 = vshll.u32 %v291, 16
      %v340 = vrot.slane %v338, 5
      %v341 = vor.u32 %v337, %v340
      %v342 = vrot.slane %v341, 4
      %v344 = vshll.u32 %v292, 16
      %v346 = vrot.slane %v344, 5
      %v347 = vsel %vm319, %v342, %v346
      %v349 = vshrl.u32 %v293, 16
      %v351 = vrot.slane %v349, 4
      %v352 = vshll.u32 %v293, 16
      %v354 = vrot.slane %v352, 5
      %v355 = vor.u32 %v351, %v354
      %v356 = vrot.slane %v355, 4
      %v358 = vshll.u32 %v294, 16
      %v360 = vrot.slane %v358, 5
      %v361 = vsel %vm319, %v356, %v360
      %v363 = vshrl.u32 %v295, 16
      %v365 = vrot.slane %v363, 4
      %v366 = vshll.u32 %v295, 16
      %v368 = vrot.slane %v366, 5
      %v369 = vor.u32 %v365, %v368
      %v370 = vrot.slane %v369, 4
      %v372 = vshll.u32 %v296, 16
      %v374 = vrot.slane %v372, 5
      %v375 = vsel %vm319, %v370, %v374
      %s376 = scalar_lea.vmem %s1, 64
      %v377 = vld [vmem:[%s376] sm:$0xf]
      %v378 = vld [vmem:[%s376 + $0x4] sm:$0xf]
      %v379 = vld [vmem:[%s376 + $0x8] sm:$0xf]
      %v380 = vld [vmem:[%s376 + $0xc] sm:$0xf]
      %v381 = vld [vmem:[%s376 + $0x10] sm:$0xf]
      %v382 = vld [vmem:[%s376 + $0x14] sm:$0xf]
      %v383 = vld [vmem:[%s376 + $0x18] sm:$0xf]
      %v384 = vld [vmem:[%s376 + $0x1c] sm:$0xf]
      %v385 = vld [vmem:[%s376 + $0x20] sm:$0xf]
      %v386 = vld [vmem:[%s376 + $0x24] sm:$0xf]
      %v387 = vld [vmem:[%s376 + $0x28] sm:$0xf]
      %v388 = vld [vmem:[%s376 + $0x2c] sm:$0xf]
      %v389 = vld [vmem:[%s376 + $0x30] sm:$0xf]
      %v390 = vld [vmem:[%s376 + $0x34] sm:$0xf]
      %v391 = vld [vmem:[%s376 + $0x38] sm:$0xf]
      %v392 = vld [vmem:[%s376 + $0x3c] sm:$0xf]
      %v393 = vunpack.c.l.b16 %v333
      %v394 = vunpack.c.l.b16 %v347
      %v395 = vunpack.c.l.b16 %v361
      %v396 = vunpack.c.l.b16 %v375
      %v397 = vpack.c.b16 %v394, %v393
      %v398 = vpack.c.b16 %v396, %v395
      %v417 = vunpack.c.l.b16 %v377
      %v418 = vunpack.c.l.b16 %v378
      %v419 = vunpack.c.l.b16 %v379
      %v420 = vunpack.c.l.b16 %v380
      %v421 = vunpack.c.l.b16 %v381
      %v422 = vunpack.c.l.b16 %v382
      %v423 = vunpack.c.l.b16 %v383
      %v424 = vunpack.c.l.b16 %v384
      %v425 = vunpack.c.l.b16 %v385
      %v426 = vunpack.c.l.b16 %v386
      %v427 = vunpack.c.l.b16 %v387
      %v428 = vunpack.c.l.b16 %v388
      %v429 = vunpack.c.l.b16 %v389
      %v430 = vunpack.c.l.b16 %v390
      %v431 = vunpack.c.l.b16 %v391
      %v432 = vunpack.c.l.b16 %v392
      %v433 = vpack.c.b16 %v418, %v417
      %v434 = vpack.c.b16 %v420, %v419
      %v435 = vpack.c.b16 %v422, %v421
      %v436 = vpack.c.b16 %v424, %v423
      %v437 = vpack.c.b16 %v426, %v425
      %v438 = vpack.c.b16 %v428, %v427
      %v439 = vpack.c.b16 %v430, %v429
      %v440 = vpack.c.b16 %v432, %v431
      %449 = vmatprep.subr.bf16.mxu0 0
      %450 = vmatpush1.bf16.msra.mxu0 %v433
      %451 = vmatprep.subr.bf16.mxu0 0
      %452 = vmatpush1.bf16.msra.mxu0 %v434
      %453 = vmatprep.subr.bf16.mxu0 0
      %454 = vmatpush1.bf16.msra.mxu0 %v435
      %455 = vmatprep.subr.bf16.mxu0 0
      %456 = vmatpush1.bf16.msra.mxu0 %v436
      %457 = vmatprep.subr.bf16.mxu0 0
      %458 = vmatpush1.bf16.msra.mxu0 %v437
      %459 = vmatprep.subr.bf16.mxu0 0
      %460 = vmatpush1.bf16.msra.mxu0 %v438
      %461 = vmatprep.subr.bf16.mxu0 0
      %462 = vmatpush1.bf16.msra.mxu0 %v439
      %463 = vmatprep.subr.bf16.mxu0 0
      %464 = vmatpush1.bf16.msra.mxu0 %v440
      %465 = vmatprep.subr.bf16.mxu0 0
      %466 = vmatpush1.bf16.msra.mxu0 0
      %467 = vmatprep.subr.bf16.mxu0 0
      %468 = vmatpush1.bf16.msra.mxu0 0
      %469 = vmatprep.subr.bf16.mxu0 0
      %470 = vmatpush1.bf16.msra.mxu0 0
      %471 = vmatprep.subr.bf16.mxu0 0
      %472 = vmatpush1.bf16.msra.mxu0 0
      %473 = vmatprep.subr.bf16.mxu0 0
      %474 = vmatpush1.bf16.msra.mxu0 0
      %475 = vmatprep.subr.bf16.mxu0 0
      %476 = vmatpush1.bf16.msra.mxu0 0
      %477 = vmatprep.subr.bf16.mxu0 0
      %478 = vmatpush1.bf16.msra.mxu0 0
      %479 = vmatprep.subr.bf16.mxu0 0
      %480 = vmatpush1.bf16.msra.mxu0 0
      %481 = vmatprep.mubr.bf16.mxu0 0
      %482 = vmatmul.mubr.bf16.gmra.mrb[0].mxu0 %v397
      %v483 = vpop.f32.mrb[0].mxu0
      %v484 = vadd.f32 0.0, %v483
      %v485 = vpop.f32.mrb[0].mxu0
      %v486 = vpop.f32.mrb[0].mxu0
      %v487 = vadd.f32 0.0, %v486
      %v488 = vpop.f32.mrb[0].mxu0
      %489 = vmatprep.mubr.bf16.mxu0 0
      %490 = vmatmul.mubr.bf16.gmra.mrb[0].mxu0 %v398
      %v491 = vpop.f32.mrb[0].mxu0
      %v492 = vadd.f32 0.0, %v491
      %v493 = vpop.f32.mrb[0].mxu0
      %v494 = vpop.f32.mrb[0].mxu0
      %v495 = vadd.f32 0.0, %v494
      %v496 = vpop.f32.mrb[0].mxu0
      %497 = vdwg.mxu0
      %v502 = vunpack.c.l.b16 %v289
      %v503 = vunpack.c.l.b16 %v291
      %v504 = vunpack.c.l.b16 %v293
      %v505 = vunpack.c.l.b16 %v295
      %v506 = vpack.c.b16 %v503, %v502
      %v507 = vpack.c.b16 %v505, %v504
      %v526 = vunpack.c.l.b16 %v301
      %v527 = vunpack.c.l.b16 %v302
      %v528 = vunpack.c.l.b16 %v303
      %v529 = vunpack.c.l.b16 %v304
      %v530 = vunpack.c.l.b16 %v305
      %v531 = vunpack.c.l.b16 %v306
      %v532 = vunpack.c.l.b16 %v307
      %v533 = vunpack.c.l.b16 %v308
      %v534 = vunpack.c.l.b16 %v309
      %v535 = vunpack.c.l.b16 %v310
      %v536 = vunpack.c.l.b16 %v311
      %v537 = vunpack.c.l.b16 %v312
      %v538 = vunpack.c.l.b16 %v313
      %v539 = vunpack.c.l.b16 %v314
      %v540 = vunpack.c.l.b16 %v315
      %v541 = vunpack.c.l.b16 %v316
      %v542 = vpack.c.b16 %v527, %v526
      %v543 = vpack.c.b16 %v529, %v528
      %v544 = vpack.c.b16 %v531, %v530
      %v545 = vpack.c.b16 %v533, %v532
      %v546 = vpack.c.b16 %v535, %v534
      %v547 = vpack.c.b16 %v537, %v536
      %v548 = vpack.c.b16 %v539, %v538
      %v549 = vpack.c.b16 %v541, %v540
      %558 = vmatprep.subr.bf16.mxu0 0
      %559 = vmatpush1.bf16.msra.mxu0 %v542
      %560 = vmatprep.subr.bf16.mxu0 0
      %561 = vmatpush1.bf16.msra.mxu0 %v543
      %562 = vmatprep.subr.bf16.mxu0 0
      %563 = vmatpush1.bf16.msra.mxu0 %v544
      %564 = vmatprep.subr.bf16.mxu0 0
      %565 = vmatpush1.bf16.msra.mxu0 %v545
      %566 = vmatprep.subr.bf16.mxu0 0
      %567 = vmatpush1.bf16.msra.mxu0 %v546
      %568 = vmatprep.subr.bf16.mxu0 0
      %569 = vmatpush1.bf16.msra.mxu0 %v547
      %570 = vmatprep.subr.bf16.mxu0 0
      %571 = vmatpush1.bf16.msra.mxu0 %v548
      %572 = vmatprep.subr.bf16.mxu0 0
      %573 = vmatpush1.bf16.msra.mxu0 %v549
      %574 = vmatprep.subr.bf16.mxu0 0
      %575 = vmatpush1.bf16.msra.mxu0 0
      %576 = vmatprep.subr.bf16.mxu0 0
      %577 = vmatpush1.bf16.msra.mxu0 0
      %578 = vmatprep.subr.bf16.mxu0 0
      %579 = vmatpush1.bf16.msra.mxu0 0
      %580 = vmatprep.subr.bf16.mxu0 0
      %581 = vmatpush1.bf16.msra.mxu0 0
      %582 = vmatprep.subr.bf16.mxu0 0
      %583 = vmatpush1.bf16.msra.mxu0 0
      %584 = vmatprep.subr.bf16.mxu0 0
      %585 = vmatpush1.bf16.msra.mxu0 0
      %586 = vmatprep.subr.bf16.mxu0 0
      %587 = vmatpush1.bf16.msra.mxu0 0
      %588 = vmatprep.subr.bf16.mxu0 0
      %589 = vmatpush1.bf16.msra.mxu0 0
      %590 = vmatprep.mubr.bf16.mxu0 0
      %591 = vmatmul.mubr.bf16.gmra.mrb[0].mxu0 %v506
      %v592 = vpop.f32.mrb[0].mxu0
      %v593 = vadd.f32 %v484, %v592
      %v594 = vpop.f32.mrb[0].mxu0
      %v595 = vpop.f32.mrb[0].mxu0
      %v596 = vadd.f32 %v487, %v595
      %v597 = vpop.f32.mrb[0].mxu0
      %598 = vmatprep.mubr.bf16.mxu0 0
      %599 = vmatmul.mubr.bf16.gmra.mrb[0].mxu0 %v507
      %v600 = vpop.f32.mrb[0].mxu0
      %v601 = vadd.f32 %v492, %v600
      %v602 = vpop.f32.mrb[0].mxu0
      %v603 = vpop.f32.mrb[0].mxu0
      %v604 = vadd.f32 %v495, %v603
      %v605 = vpop.f32.mrb[0].mxu0
      %606 = vdwg.mxu0
      %vm611 = vcmask 1042432
      %vm612 = vcmask 1046532
      %vm613 = vmor %vm611, %vm612
      %v614 = vrot.slane %v289, 5
      %v615 = vrot.slane %v614, 4
      %v616 = vrot.slane %v290, 5
      %v617 = vsel %vm613, %v615, %v616
      %v618 = vrot.slane %v291, 5
      %v619 = vrot.slane %v618, 4
      %v620 = vrot.slane %v292, 5
      %v621 = vsel %vm613, %v619, %v620
      %v622 = vrot.slane %v293, 5
      %v623 = vrot.slane %v622, 4
      %v624 = vrot.slane %v294, 5
      %v625 = vsel %vm613, %v623, %v624
      %v626 = vrot.slane %v295, 5
      %v627 = vrot.slane %v626, 4
      %v628 = vrot.slane %v296, 5
      %v629 = vsel %vm613, %v627, %v628
      %s630 = scalar_lea.vmem %s1, 128
      %v631 = vld [vmem:[%s630] sm:$0xf]
      %v632 = vld [vmem:[%s630 + $0x4] sm:$0xf]
      %v633 = vld [vmem:[%s630 + $0x8] sm:$0xf]
      %v634 = vld [vmem:[%s630 + $0xc] sm:$0xf]
      %v635 = vld [vmem:[%s630 + $0x10] sm:$0xf]
      %v636 = vld [vmem:[%s630 + $0x14] sm:$0xf]
      %v637 = vld [vmem:[%s630 + $0x18] sm:$0xf]
      %v638 = vld [vmem:[%s630 + $0x1c] sm:$0xf]
      %v639 = vld [vmem:[%s630 + $0x20] sm:$0xf]
      %v640 = vld [vmem:[%s630 + $0x24] sm:$0xf]
      %v641 = vld [vmem:[%s630 + $0x28] sm:$0xf]
      %v642 = vld [vmem:[%s630 + $0x2c] sm:$0xf]
      %v643 = vld [vmem:[%s630 + $0x30] sm:$0xf]
      %v644 = vld [vmem:[%s630 + $0x34] sm:$0xf]
      %v645 = vld [vmem:[%s630 + $0x38] sm:$0xf]
      %v646 = vld [vmem:[%s630 + $0x3c] sm:$0xf]
      %v647 = vunpack.c.l.b16 %v617
      %v648 = vunpack.c.l.b16 %v621
      %v649 = vunpack.c.l.b16 %v625
      %v650 = vunpack.c.l.b16 %v629
      %v651 = vpack.c.b16 %v648, %v647
      %v652 = vpack.c.b16 %v650, %v649
      %v671 = vunpack.c.l.b16 %v631
      %v672 = vunpack.c.l.b16 %v632
      %v673 = vunpack.c.l.b16 %v633
      %v674 = vunpack.c.l.b16 %v634
      %v675 = vunpack.c.l.b16 %v635
      %v676 = vunpack.c.l.b16 %v636
      %v677 = vunpack.c.l.b16 %v637
      %v678 = vunpack.c.l.b16 %v638
      %v679 = vunpack.c.l.b16 %v639
      %v680 = vunpack.c.l.b16 %v640
      %v681 = vunpack.c.l.b16 %v641
      %v682 = vunpack.c.l.b16 %v642
      %v683 = vunpack.c.l.b16 %v643
      %v684 = vunpack.c.l.b16 %v644
      %v685 = vunpack.c.l.b16 %v645
      %v686 = vunpack.c.l.b16 %v646
      %v687 = vpack.c.b16 %v672, %v671
      %v688 = vpack.c.b16 %v674, %v673
      %v689 = vpack.c.b16 %v676, %v675
      %v690 = vpack.c.b16 %v678, %v677
      %v691 = vpack.c.b16 %v680, %v679
      %v692 = vpack.c.b16 %v682, %v681
      %v693 = vpack.c.b16 %v684, %v683
      %v694 = vpack.c.b16 %v686, %v685
      %703 = vmatprep.subr.bf16.mxu0 0
      %704 = vmatpush1.bf16.msra.mxu0 %v687
      %705 = vmatprep.subr.bf16.mxu0 0
      %706 = vmatpush1.bf16.msra.mxu0 %v688
      %707 = vmatprep.subr.bf16.mxu0 0
      %708 = vmatpush1.bf16.msra.mxu0 %v689
      %709 = vmatprep.subr.bf16.mxu0 0
      %710 = vmatpush1.bf16.msra.mxu0 %v690
      %711 = vmatprep.subr.bf16.mxu0 0
      %712 = vmatpush1.bf16.msra.mxu0 %v691
      %713 = vmatprep.subr.bf16.mxu0 0
      %714 = vmatpush1.bf16.msra.mxu0 %v692
      %715 = vmatprep.subr.bf16.mxu0 0
      %716 = vmatpush1.bf16.msra.mxu0 %v693
      %717 = vmatprep.subr.bf16.mxu0 0
      %718 = vmatpush1.bf16.msra.mxu0 %v694
      %719 = vmatprep.subr.bf16.mxu0 0
      %720 = vmatpush1.bf16.msra.mxu0 0
      %721 = vmatprep.subr.bf16.mxu0 0
      %722 = vmatpush1.bf16.msra.mxu0 0
      %723 = vmatprep.subr.bf16.mxu0 0
      %724 = vmatpush1.bf16.msra.mxu0 0
      %725 = vmatprep.subr.bf16.mxu0 0
      %726 = vmatpush1.bf16.msra.mxu0 0
      %727 = vmatprep.subr.bf16.mxu0 0
      %728 = vmatpush1.bf16.msra.mxu0 0
      %729 = vmatprep.subr.bf16.mxu0 0
      %730 = vmatpush1.bf16.msra.mxu0 0
      %731 = vmatprep.subr.bf16.mxu0 0
      %732 = vmatpush1.bf16.msra.mxu0 0
      %733 = vmatprep.subr.bf16.mxu0 0
      %734 = vmatpush1.bf16.msra.mxu0 0
      %735 = vmatprep.mubr.bf16.mxu0 0
      %736 = vmatmul.mubr.bf16.gmra.mrb[0].mxu0 %v651
      %v737 = vpop.f32.mrb[0].mxu0
      %v738 = vadd.f32 0.0, %v737
      %v739 = vpop.f32.mrb[0].mxu0
      %v740 = vpop.f32.mrb[0].mxu0
      %v741 = vadd.f32 0.0, %v740
      %v742 = vpop.f32.mrb[0].mxu0
      %743 = vmatprep.mubr.bf16.mxu0 0
      %744 = vmatmul.mubr.bf16.gmra.mrb[0].mxu0 %v652
      %v745 = vpop.f32.mrb[0].mxu0
      %v746 = vadd.f32 0.0, %v745
      %v747 = vpop.f32.mrb[0].mxu0
      %v748 = vpop.f32.mrb[0].mxu0
      %v749 = vadd.f32 0.0, %v748
      %v750 = vpop.f32.mrb[0].mxu0
      %751 = vdwg.mxu0
      %v752 = vadd.f32 %v593, %v738
      %v753 = vadd.f32 %v596, %v741
      %v754 = vadd.f32 %v601, %v746
      %v755 = vadd.f32 %v604, %v749
      %s756 = scalar_lea.vmem %s1, 192
      %v757 = vld [vmem:[%s756] sm:$0xf]
      %v758 = vld [vmem:[%s756 + $0x4] sm:$0xf]
      %v759 = vld [vmem:[%s756 + $0x8] sm:$0xf]
      %v760 = vld [vmem:[%s756 + $0xc] sm:$0xf]
      %v761 = vld [vmem:[%s756 + $0x10] sm:$0xf]
      %v762 = vld [vmem:[%s756 + $0x14] sm:$0xf]
      %v763 = vld [vmem:[%s756 + $0x18] sm:$0xf]
      %v764 = vld [vmem:[%s756 + $0x1c] sm:$0xf]
      %v765 = vld [vmem:[%s756 + $0x20] sm:$0xf]
      %v766 = vld [vmem:[%s756 + $0x24] sm:$0xf]
      %v767 = vld [vmem:[%s756 + $0x28] sm:$0xf]
      %v768 = vld [vmem:[%s756 + $0x2c] sm:$0xf]
      %v769 = vld [vmem:[%s756 + $0x30] sm:$0xf]
      %v770 = vld [vmem:[%s756 + $0x34] sm:$0xf]
      %v771 = vld [vmem:[%s756 + $0x38] sm:$0xf]
      %v772 = vld [vmem:[%s756 + $0x3c] sm:$0xf]
      %v774 = vunpack.c.l.b16 %v297
      %v775 = vpack.c.b16 %v504, %v503
      %v776 = vpack.c.b16 %v774, %v505
      %v795 = vunpack.c.l.b16 %v757
      %v796 = vunpack.c.l.b16 %v758
      %v797 = vunpack.c.l.b16 %v759
      %v798 = vunpack.c.l.b16 %v760
      %v799 = vunpack.c.l.b16 %v761
      %v800 = vunpack.c.l.b16 %v762
      %v801 = vunpack.c.l.b16 %v763
      %v802 = vunpack.c.l.b16 %v764
      %v803 = vunpack.c.l.b16 %v765
      %v804 = vunpack.c.l.b16 %v766
      %v805 = vunpack.c.l.b16 %v767
      %v806 = vunpack.c.l.b16 %v768
      %v807 = vunpack.c.l.b16 %v769
      %v808 = vunpack.c.l.b16 %v770
      %v809 = vunpack.c.l.b16 %v771
      %v810 = vunpack.c.l.b16 %v772
      %v811 = vpack.c.b16 %v796, %v795
      %v812 = vpack.c.b16 %v798, %v797
      %v813 = vpack.c.b16 %v800, %v799
      %v814 = vpack.c.b16 %v802, %v801
      %v815 = vpack.c.b16 %v804, %v803
      %v816 = vpack.c.b16 %v806, %v805
      %v817 = vpack.c.b16 %v808, %v807
      %v818 = vpack.c.b16 %v810, %v809
      %827 = vmatprep.subr.bf16.mxu0 0
      %828 = vmatpush1.bf16.msra.mxu0 %v811
      %829 = vmatprep.subr.bf16.mxu0 0
      %830 = vmatpush1.bf16.msra.mxu0 %v812
      %831 = vmatprep.subr.bf16.mxu0 0
      %832 = vmatpush1.bf16.msra.mxu0 %v813
      %833 = vmatprep.subr.bf16.mxu0 0
      %834 = vmatpush1.bf16.msra.mxu0 %v814
      %835 = vmatprep.subr.bf16.mxu0 0
      %836 = vmatpush1.bf16.msra.mxu0 %v815
      %837 = vmatprep.subr.bf16.mxu0 0
      %838 = vmatpush1.bf16.msra.mxu0 %v816
      %839 = vmatprep.subr.bf16.mxu0 0
      %840 = vmatpush1.bf16.msra.mxu0 %v817
      %841 = vmatprep.subr.bf16.mxu0 0
      %842 = vmatpush1.bf16.msra.mxu0 %v818
      %843 = vmatprep.subr.bf16.mxu0 0
      %844 = vmatpush1.bf16.msra.mxu0 0
      %845 = vmatprep.subr.bf16.mxu0 0
      %846 = vmatpush1.bf16.msra.mxu0 0
      %847 = vmatprep.subr.bf16.mxu0 0
      %848 = vmatpush1.bf16.msra.mxu0 0
      %849 = vmatprep.subr.bf16.mxu0 0
      %850 = vmatpush1.bf16.msra.mxu0 0
      %851 = vmatprep.subr.bf16.mxu0 0
      %852 = vmatpush1.bf16.msra.mxu0 0
      %853 = vmatprep.subr.bf16.mxu0 0
      %854 = vmatpush1.bf16.msra.mxu0 0
      %855 = vmatprep.subr.bf16.mxu0 0
      %856 = vmatpush1.bf16.msra.mxu0 0
      %857 = vmatprep.subr.bf16.mxu0 0
      %858 = vmatpush1.bf16.msra.mxu0 0
      %859 = vmatprep.mubr.bf16.mxu0 0
      %860 = vmatmul.mubr.bf16.gmra.mrb[0].mxu0 %v775
      %v861 = vpop.f32.mrb[0].mxu0
      %v862 = vadd.f32 0.0, %v861
      %v863 = vpop.f32.mrb[0].mxu0
      %v864 = vpop.f32.mrb[0].mxu0
      %v865 = vadd.f32 0.0, %v864
      %v866 = vpop.f32.mrb[0].mxu0
      %867 = vmatprep.mubr.bf16.mxu0 0
      %868 = vmatmul.mubr.bf16.gmra.mrb[0].mxu0 %v776
      %v869 = vpop.f32.mrb[0].mxu0
      %v870 = vadd.f32 0.0, %v869
      %v871 = vpop.f32.mrb[0].mxu0
      %v872 = vpop.f32.mrb[0].mxu0
      %v873 = vadd.f32 0.0, %v872
      %v874 = vpop.f32.mrb[0].mxu0
      %875 = vdwg.mxu0
      %v876 = vadd.f32 %v752, %v862
      %v877 = vadd.f32 %v753, %v865
      %v878 = vadd.f32 %v754, %v870
      %v879 = vadd.f32 %v755, %v873
      %v881 = vshrl.u32 %v297, 16
      %v883 = vrot.slane %v881, 4
      %v884 = vshll.u32 %v297, 16
      %v886 = vrot.slane %v884, 5
      %v887 = vor.u32 %v883, %v886
      %v888 = vrot.slane %v887, 4
      %v890 = vshll.u32 %v298, 16
      %v892 = vrot.slane %v890, 5
      %v893 = vsel %vm319, %v888, %v892
      %s894 = scalar_lea.vmem %s1, 256
      %v895 = vld [vmem:[%s894] sm:$0xf]
      %v896 = vld [vmem:[%s894 + $0x4] sm:$0xf]
      %v897 = vld [vmem:[%s894 + $0x8] sm:$0xf]
      %v898 = vld [vmem:[%s894 + $0xc] sm:$0xf]
      %v899 = vld [vmem:[%s894 + $0x10] sm:$0xf]
      %v900 = vld [vmem:[%s894 + $0x14] sm:$0xf]
      %v901 = vld [vmem:[%s894 + $0x18] sm:$0xf]
      %v902 = vld [vmem:[%s894 + $0x1c] sm:$0xf]
      %v903 = vld [vmem:[%s894 + $0x20] sm:$0xf]
      %v904 = vld [vmem:[%s894 + $0x24] sm:$0xf]
      %v905 = vld [vmem:[%s894 + $0x28] sm:$0xf]
      %v906 = vld [vmem:[%s894 + $0x2c] sm:$0xf]
      %v907 = vld [vmem:[%s894 + $0x30] sm:$0xf]
      %v908 = vld [vmem:[%s894 + $0x34] sm:$0xf]
      %v909 = vld [vmem:[%s894 + $0x38] sm:$0xf]
      %v910 = vld [vmem:[%s894 + $0x3c] sm:$0xf]
      %v911 = vunpack.c.l.b16 %v893
      %v912 = vpack.c.b16 %v395, %v394
      %v913 = vpack.c.b16 %v911, %v396
      %v932 = vunpack.c.l.b16 %v895
      %v933 = vunpack.c.l.b16 %v896
      %v934 = vunpack.c.l.b16 %v897
      %v935 = vunpack.c.l.b16 %v898
      %v936 = vunpack.c.l.b16 %v899
      %v937 = vunpack.c.l.b16 %v900
      %v938 = vunpack.c.l.b16 %v901
      %v939 = vunpack.c.l.b16 %v902
      %v940 = vunpack.c.l.b16 %v903
      %v941 = vunpack.c.l.b16 %v904
      %v942 = vunpack.c.l.b16 %v905
      %v943 = vunpack.c.l.b16 %v906
      %v944 = vunpack.c.l.b16 %v907
      %v945 = vunpack.c.l.b16 %v908
      %v946 = vunpack.c.l.b16 %v909
      %v947 = vunpack.c.l.b16 %v910
      %v948 = vpack.c.b16 %v933, %v932
      %v949 = vpack.c.b16 %v935, %v934
      %v950 = vpack.c.b16 %v937, %v936
      %v951 = vpack.c.b16 %v939, %v938
      %v952 = vpack.c.b16 %v941, %v940
      %v953 = vpack.c.b16 %v943, %v942
      %v954 = vpack.c.b16 %v945, %v944
      %v955 = vpack.c.b16 %v947, %v946
      %964 = vmatprep.subr.bf16.mxu0 0
      %965 = vmatpush1.bf16.msra.mxu0 %v948
      %966 = vmatprep.subr.bf16.mxu0 0
      %967 = vmatpush1.bf16.msra.mxu0 %v949
      %968 = vmatprep.subr.bf16.mxu0 0
      %969 = vmatpush1.bf16.msra.mxu0 %v950
      %970 = vmatprep.subr.bf16.mxu0 0
      %971 = vmatpush1.bf16.msra.mxu0 %v951
      %972 = vmatprep.subr.bf16.mxu0 0
      %973 = vmatpush1.bf16.msra.mxu0 %v952
      %974 = vmatprep.subr.bf16.mxu0 0
      %975 = vmatpush1.bf16.msra.mxu0 %v953
      %976 = vmatprep.subr.bf16.mxu0 0
      %977 = vmatpush1.bf16.msra.mxu0 %v954
      %978 = vmatprep.subr.bf16.mxu0 0
      %979 = vmatpush1.bf16.msra.mxu0 %v955
      %980 = vmatprep.subr.bf16.mxu0 0
      %981 = vmatpush1.bf16.msra.mxu0 0
      %982 = vmatprep.subr.bf16.mxu0 0
      %983 = vmatpush1.bf16.msra.mxu0 0
      %984 = vmatprep.subr.bf16.mxu0 0
      %985 = vmatpush1.bf16.msra.mxu0 0
      %986 = vmatprep.subr.bf16.mxu0 0
      %987 = vmatpush1.bf16.msra.mxu0 0
      %988 = vmatprep.subr.bf16.mxu0 0
      %989 = vmatpush1.bf16.msra.mxu0 0
      %990 = vmatprep.subr.bf16.mxu0 0
      %991 = vmatpush1.bf16.msra.mxu0 0
      %992 = vmatprep.subr.bf16.mxu0 0
      %993 = vmatpush1.bf16.msra.mxu0 0
      %994 = vmatprep.subr.bf16.mxu0 0
      %995 = vmatpush1.bf16.msra.mxu0 0
      %996 = vmatprep.mubr.bf16.mxu0 0
      %997 = vmatmul.mubr.bf16.gmra.mrb[0].mxu0 %v912
      %v998 = vpop.f32.mrb[0].mxu0
      %v999 = vadd.f32 0.0, %v998
      %v1000 = vpop.f32.mrb[0].mxu0
      %v1001 = vpop.f32.mrb[0].mxu0
      %v1002 = vadd.f32 0.0, %v1001
      %v1003 = vpop.f32.mrb[0].mxu0
      %1004 = vmatprep.mubr.bf16.mxu0 0
      %1005 = vmatmul.mubr.bf16.gmra.mrb[0].mxu0 %v913
      %v1006 = vpop.f32.mrb[0].mxu0
      %v1007 = vadd.f32 0.0, %v1006
      %v1008 = vpop.f32.mrb[0].mxu0
      %v1009 = vpop.f32.mrb[0].mxu0
      %v1010 = vadd.f32 0.0, %v1009
      %v1011 = vpop.f32.mrb[0].mxu0
      %1012 = vdwg.mxu0
      %v1013 = vadd.f32 %v876, %v999
      %v1014 = vadd.f32 %v877, %v1002
      %v1015 = vadd.f32 %v878, %v1007
      %v1016 = vadd.f32 %v879, %v1010
      %v1018 = vrot.slane %v297, 5
      %v1019 = vrot.slane %v1018, 4
      %v1020 = vrot.slane %v298, 5
      %v1021 = vsel %vm613, %v1019, %v1020
      %s1022 = scalar_lea.vmem %s1, 320
      %v1023 = vld [vmem:[%s1022] sm:$0xf]
      %v1024 = vld [vmem:[%s1022 + $0x4] sm:$0xf]
      %v1025 = vld [vmem:[%s1022 + $0x8] sm:$0xf]
      %v1026 = vld [vmem:[%s1022 + $0xc] sm:$0xf]
      %v1027 = vld [vmem:[%s1022 + $0x10] sm:$0xf]
      %v1028 = vld [vmem:[%s1022 + $0x14] sm:$0xf]
      %v1029 = vld [vmem:[%s1022 + $0x18] sm:$0xf]
      %v1030 = vld [vmem:[%s1022 + $0x1c] sm:$0xf]
      %v1031 = vld [vmem:[%s1022 + $0x20] sm:$0xf]
      %v1032 = vld [vmem:[%s1022 + $0x24] sm:$0xf]
      %v1033 = vld [vmem:[%s1022 + $0x28] sm:$0xf]
      %v1034 = vld [vmem:[%s1022 + $0x2c] sm:$0xf]
      %v1035 = vld [vmem:[%s1022 + $0x30] sm:$0xf]
      %v1036 = vld [vmem:[%s1022 + $0x34] sm:$0xf]
      %v1037 = vld [vmem:[%s1022 + $0x38] sm:$0xf]
      %v1038 = vld [vmem:[%s1022 + $0x3c] sm:$0xf]
      %v1039 = vunpack.c.l.b16 %v1021
      %v1040 = vpack.c.b16 %v649, %v648
      %v1041 = vpack.c.b16 %v1039, %v650
      %v1060 = vunpack.c.l.b16 %v1023
      %v1061 = vunpack.c.l.b16 %v1024
      %v1062 = vunpack.c.l.b16 %v1025
      %v1063 = vunpack.c.l.b16 %v1026
      %v1064 = vunpack.c.l.b16 %v1027
      %v1065 = vunpack.c.l.b16 %v1028
      %v1066 = vunpack.c.l.b16 %v1029
      %v1067 = vunpack.c.l.b16 %v1030
      %v1068 = vunpack.c.l.b16 %v1031
      %v1069 = vunpack.c.l.b16 %v1032
      %v1070 = vunpack.c.l.b16 %v1033
      %v1071 = vunpack.c.l.b16 %v1034
      %v1072 = vunpack.c.l.b16 %v1035
      %v1073 = vunpack.c.l.b16 %v1036
      %v1074 = vunpack.c.l.b16 %v1037
      %v1075 = vunpack.c.l.b16 %v1038
      %v1076 = vpack.c.b16 %v1061, %v1060
      %v1077 = vpack.c.b16 %v1063, %v1062
      %v1078 = vpack.c.b16 %v1065, %v1064
      %v1079 = vpack.c.b16 %v1067, %v1066
      %v1080 = vpack.c.b16 %v1069, %v1068
      %v1081 = vpack.c.b16 %v1071, %v1070
      %v1082 = vpack.c.b16 %v1073, %v1072
      %v1083 = vpack.c.b16 %v1075, %v1074
      %1092 = vmatprep.subr.bf16.mxu0 0
      %1093 = vmatpush1.bf16.msra.mxu0 %v1076
      %1094 = vmatprep.subr.bf16.mxu0 0
      %1095 = vmatpush1.bf16.msra.mxu0 %v1077
      %1096 = vmatprep.subr.bf16.mxu0 0
      %1097 = vmatpush1.bf16.msra.mxu0 %v1078
      %1098 = vmatprep.subr.bf16.mxu0 0
      %1099 = vmatpush1.bf16.msra.mxu0 %v1079
      %1100 = vmatprep.subr.bf16.mxu0 0
      %1101 = vmatpush1.bf16.msra.mxu0 %v1080
      %1102 = vmatprep.subr.bf16.mxu0 0
      %1103 = vmatpush1.bf16.msra.mxu0 %v1081
      %1104 = vmatprep.subr.bf16.mxu0 0
      %1105 = vmatpush1.bf16.msra.mxu0 %v1082
      %1106 = vmatprep.subr.bf16.mxu0 0
      %1107 = vmatpush1.bf16.msra.mxu0 %v1083
      %1108 = vmatprep.subr.bf16.mxu0 0
      %1109 = vmatpush1.bf16.msra.mxu0 0
      %1110 = vmatprep.subr.bf16.mxu0 0
      %1111 = vmatpush1.bf16.msra.mxu0 0
      %1112 = vmatprep.subr.bf16.mxu0 0
      %1113 = vmatpush1.bf16.msra.mxu0 0
      %1114 = vmatprep.subr.bf16.mxu0 0
      %1115 = vmatpush1.bf16.msra.mxu0 0
      %1116 = vmatprep.subr.bf16.mxu0 0
      %1117 = vmatpush1.bf16.msra.mxu0 0
      %1118 = vmatprep.subr.bf16.mxu0 0
      %1119 = vmatpush1.bf16.msra.mxu0 0
      %1120 = vmatprep.subr.bf16.mxu0 0
      %1121 = vmatpush1.bf16.msra.mxu0 0
      %1122 = vmatprep.subr.bf16.mxu0 0
      %1123 = vmatpush1.bf16.msra.mxu0 0
      %1124 = vmatprep.mubr.bf16.mxu0 0
      %1125 = vmatmul.mubr.bf16.gmra.mrb[0].mxu0 %v1040
      %v1126 = vpop.f32.mrb[0].mxu0
      %v1127 = vadd.f32 0.0, %v1126
      %v1128 = vpop.f32.mrb[0].mxu0
      %v1129 = vpop.f32.mrb[0].mxu0
      %v1130 = vadd.f32 0.0, %v1129
      %v1131 = vpop.f32.mrb[0].mxu0
      %1132 = vmatprep.mubr.bf16.mxu0 0
      %1133 = vmatmul.mubr.bf16.gmra.mrb[0].mxu0 %v1041
      %v1134 = vpop.f32.mrb[0].mxu0
      %v1135 = vadd.f32 0.0, %v1134
      %v1136 = vpop.f32.mrb[0].mxu0
      %v1137 = vpop.f32.mrb[0].mxu0
      %v1138 = vadd.f32 0.0, %v1137
      %v1139 = vpop.f32.mrb[0].mxu0
      %1140 = vdwg.mxu0
      %v1141 = vadd.f32 %v1013, %v1127
      %v1142 = vadd.f32 %v1014, %v1130
      %v1143 = vadd.f32 %v1015, %v1135
      %v1144 = vadd.f32 %v1016, %v1138
      %s1145 = scalar_lea.vmem %s1, 384
      %v1146 = vld [vmem:[%s1145] sm:$0xf]
      %v1147 = vld [vmem:[%s1145 + $0x4] sm:$0xf]
      %v1148 = vld [vmem:[%s1145 + $0x8] sm:$0xf]
      %v1149 = vld [vmem:[%s1145 + $0xc] sm:$0xf]
      %v1150 = vld [vmem:[%s1145 + $0x10] sm:$0xf]
      %v1151 = vld [vmem:[%s1145 + $0x14] sm:$0xf]
      %v1152 = vld [vmem:[%s1145 + $0x18] sm:$0xf]
      %v1153 = vld [vmem:[%s1145 + $0x1c] sm:$0xf]
      %v1154 = vld [vmem:[%s1145 + $0x20] sm:$0xf]
      %v1155 = vld [vmem:[%s1145 + $0x24] sm:$0xf]
      %v1156 = vld [vmem:[%s1145 + $0x28] sm:$0xf]
      %v1157 = vld [vmem:[%s1145 + $0x2c] sm:$0xf]
      %v1158 = vld [vmem:[%s1145 + $0x30] sm:$0xf]
      %v1159 = vld [vmem:[%s1145 + $0x34] sm:$0xf]
      %v1160 = vld [vmem:[%s1145 + $0x38] sm:$0xf]
      %v1161 = vld [vmem:[%s1145 + $0x3c] sm:$0xf]
      %v1163 = vunpack.c.l.b16 %v299
      %v1164 = vpack.c.b16 %v1163, %v774
      %v1182 = vunpack.c.l.b16 %v1146
      %v1183 = vunpack.c.l.b16 %v1147
      %v1184 = vunpack.c.l.b16 %v1148
      %v1185 = vunpack.c.l.b16 %v1149
      %v1186 = vunpack.c.l.b16 %v1150
      %v1187 = vunpack.c.l.b16 %v1151
      %v1188 = vunpack.c.l.b16 %v1152
      %v1189 = vunpack.c.l.b16 %v1153
      %v1190 = vunpack.c.l.b16 %v1154
      %v1191 = vunpack.c.l.b16 %v1155
      %v1192 = vunpack.c.l.b16 %v1156
      %v1193 = vunpack.c.l.b16 %v1157
      %v1194 = vunpack.c.l.b16 %v1158
      %v1195 = vunpack.c.l.b16 %v1159
      %v1196 = vunpack.c.l.b16 %v1160
      %v1197 = vunpack.c.l.b16 %v1161
      %v1198 = vpack.c.b16 %v1183, %v1182
      %v1199 = vpack.c.b16 %v1185, %v1184
      %v1200 = vpack.c.b16 %v1187, %v1186
      %v1201 = vpack.c.b16 %v1189, %v1188
      %v1202 = vpack.c.b16 %v1191, %v1190
      %v1203 = vpack.c.b16 %v1193, %v1192
      %v1204 = vpack.c.b16 %v1195, %v1194
      %v1205 = vpack.c.b16 %v1197, %v1196
      %1214 = vmatprep.subr.bf16.mxu0 0
      %1215 = vmatpush1.bf16.msra.mxu0 %v1198
      %1216 = vmatprep.subr.bf16.mxu0 0
      %1217 = vmatpush1.bf16.msra.mxu0 %v1199
      %1218 = vmatprep.subr.bf16.mxu0 0
      %1219 = vmatpush1.bf16.msra.mxu0 %v1200
      %1220 = vmatprep.subr.bf16.mxu0 0
      %1221 = vmatpush1.bf16.msra.mxu0 %v1201
      %1222 = vmatprep.subr.bf16.mxu0 0
      %1223 = vmatpush1.bf16.msra.mxu0 %v1202
      %1224 = vmatprep.subr.bf16.mxu0 0
      %1225 = vmatpush1.bf16.msra.mxu0 %v1203
      %1226 = vmatprep.subr.bf16.mxu0 0
      %1227 = vmatpush1.bf16.msra.mxu0 %v1204
      %1228 = vmatprep.subr.bf16.mxu0 0
      %1229 = vmatpush1.bf16.msra.mxu0 %v1205
      %1230 = vmatprep.subr.bf16.mxu0 0
      %1231 = vmatpush1.bf16.msra.mxu0 0
      %1232 = vmatprep.subr.bf16.mxu0 0
      %1233 = vmatpush1.bf16.msra.mxu0 0
      %1234 = vmatprep.subr.bf16.mxu0 0
      %1235 = vmatpush1.bf16.msra.mxu0 0
      %1236 = vmatprep.subr.bf16.mxu0 0
      %1237 = vmatpush1.bf16.msra.mxu0 0
      %1238 = vmatprep.subr.bf16.mxu0 0
      %1239 = vmatpush1.bf16.msra.mxu0 0
      %1240 = vmatprep.subr.bf16.mxu0 0
      %1241 = vmatpush1.bf16.msra.mxu0 0
      %1242 = vmatprep.subr.bf16.mxu0 0
      %1243 = vmatpush1.bf16.msra.mxu0 0
      %1244 = vmatprep.subr.bf16.mxu0 0
      %1245 = vmatpush1.bf16.msra.mxu0 0
      %1246 = vmatprep.mubr.bf16.mxu0 0
      %1247 = vmatmul.mubr.bf16.gmra.mrb[0].mxu0 %v507
      %v1248 = vpop.f32.mrb[0].mxu0
      %v1249 = vadd.f32 0.0, %v1248
      %v1250 = vpop.f32.mrb[0].mxu0
      %v1251 = vpop.f32.mrb[0].mxu0
      %v1252 = vadd.f32 0.0, %v1251
      %v1253 = vpop.f32.mrb[0].mxu0
      %1254 = vmatprep.mubr.bf16.mxu0 0
      %1255 = vmatmul.mubr.bf16.gmra.mrb[0].mxu0 %v1164
      %v1256 = vpop.f32.mrb[0].mxu0
      %v1257 = vadd.f32 0.0, %v1256
      %v1258 = vpop.f32.mrb[0].mxu0
      %v1259 = vpop.f32.mrb[0].mxu0
      %v1260 = vadd.f32 0.0, %v1259
      %v1261 = vpop.f32.mrb[0].mxu0
      %1262 = vdwg.mxu0
      %v1263 = vadd.f32 %v1141, %v1249
      %v1264 = vadd.f32 %v1142, %v1252
      %v1265 = vadd.f32 %v1143, %v1257
      %v1266 = vadd.f32 %v1144, %v1260
      %v1268 = vshrl.u32 %v299, 16
      %v1270 = vrot.slane %v1268, 4
      %v1271 = vshll.u32 %v299, 16
      %v1273 = vrot.slane %v1271, 5
      %v1274 = vor.u32 %v1270, %v1273
      %v1275 = vrot.slane %v1274, 4
      %v1277 = vshll.u32 %v300, 16
      %v1279 = vrot.slane %v1277, 5
      %v1280 = vsel %vm319, %v1275, %v1279
      %s1281 = scalar_lea.vmem %s1, 448
      %v1282 = vld [vmem:[%s1281] sm:$0xf]
      %v1283 = vld [vmem:[%s1281 + $0x4] sm:$0xf]
      %v1284 = vld [vmem:[%s1281 + $0x8] sm:$0xf]
      %v1285 = vld [vmem:[%s1281 + $0xc] sm:$0xf]
      %v1286 = vld [vmem:[%s1281 + $0x10] sm:$0xf]
      %v1287 = vld [vmem:[%s1281 + $0x14] sm:$0xf]
      %v1288 = vld [vmem:[%s1281 + $0x18] sm:$0xf]
      %v1289 = vld [vmem:[%s1281 + $0x1c] sm:$0xf]
      %v1290 = vld [vmem:[%s1281 + $0x20] sm:$0xf]
      %v1291 = vld [vmem:[%s1281 + $0x24] sm:$0xf]
      %v1292 = vld [vmem:[%s1281 + $0x28] sm:$0xf]
      %v1293 = vld [vmem:[%s1281 + $0x2c] sm:$0xf]
      %v1294 = vld [vmem:[%s1281 + $0x30] sm:$0xf]
      %v1295 = vld [vmem:[%s1281 + $0x34] sm:$0xf]
      %v1296 = vld [vmem:[%s1281 + $0x38] sm:$0xf]
      %v1297 = vld [vmem:[%s1281 + $0x3c] sm:$0xf]
      %v1298 = vunpack.c.l.b16 %v1280
      %v1299 = vpack.c.b16 %v1298, %v911
      %v1317 = vunpack.c.l.b16 %v1282
      %v1318 = vunpack.c.l.b16 %v1283
      %v1319 = vunpack.c.l.b16 %v1284
      %v1320 = vunpack.c.l.b16 %v1285
      %v1321 = vunpack.c.l.b16 %v1286
      %v1322 = vunpack.c.l.b16 %v1287
      %v1323 = vunpack.c.l.b16 %v1288
      %v1324 = vunpack.c.l.b16 %v1289
      %v1325 = vunpack.c.l.b16 %v1290
      %v1326 = vunpack.c.l.b16 %v1291
      %v1327 = vunpack.c.l.b16 %v1292
      %v1328 = vunpack.c.l.b16 %v1293
      %v1329 = vunpack.c.l.b16 %v1294
      %v1330 = vunpack.c.l.b16 %v1295
      %v1331 = vunpack.c.l.b16 %v1296
      %v1332 = vunpack.c.l.b16 %v1297
      %v1333 = vpack.c.b16 %v1318, %v1317
      %v1334 = vpack.c.b16 %v1320, %v1319
      %v1335 = vpack.c.b16 %v1322, %v1321
      %v1336 = vpack.c.b16 %v1324, %v1323
      %v1337 = vpack.c.b16 %v1326, %v1325
      %v1338 = vpack.c.b16 %v1328, %v1327
      %v1339 = vpack.c.b16 %v1330, %v1329
      %v1340 = vpack.c.b16 %v1332, %v1331
      %1349 = vmatprep.subr.bf16.mxu0 0
      %1350 = vmatpush1.bf16.msra.mxu0 %v1333
      %1351 = vmatprep.subr.bf16.mxu0 0
      %1352 = vmatpush1.bf16.msra.mxu0 %v1334
      %1353 = vmatprep.subr.bf16.mxu0 0
      %1354 = vmatpush1.bf16.msra.mxu0 %v1335
      %1355 = vmatprep.subr.bf16.mxu0 0
      %1356 = vmatpush1.bf16.msra.mxu0 %v1336
      %1357 = vmatprep.subr.bf16.mxu0 0
      %1358 = vmatpush1.bf16.msra.mxu0 %v1337
      %1359 = vmatprep.subr.bf16.mxu0 0
      %1360 = vmatpush1.bf16.msra.mxu0 %v1338
      %1361 = vmatprep.subr.bf16.mxu0 0
      %1362 = vmatpush1.bf16.msra.mxu0 %v1339
      %1363 = vmatprep.subr.bf16.mxu0 0
      %1364 = vmatpush1.bf16.msra.mxu0 %v1340
      %1365 = vmatprep.subr.bf16.mxu0 0
      %1366 = vmatpush1.bf16.msra.mxu0 0
      %1367 = vmatprep.subr.bf16.mxu0 0
      %1368 = vmatpush1.bf16.msra.mxu0 0
      %1369 = vmatprep.subr.bf16.mxu0 0
      %1370 = vmatpush1.bf16.msra.mxu0 0
      %1371 = vmatprep.subr.bf16.mxu0 0
      %1372 = vmatpush1.bf16.msra.mxu0 0
      %1373 = vmatprep.subr.bf16.mxu0 0
      %1374 = vmatpush1.bf16.msra.mxu0 0
      %1375 = vmatprep.subr.bf16.mxu0 0
      %1376 = vmatpush1.bf16.msra.mxu0 0
      %1377 = vmatprep.subr.bf16.mxu0 0
      %1378 = vmatpush1.bf16.msra.mxu0 0
      %1379 = vmatprep.subr.bf16.mxu0 0
      %1380 = vmatpush1.bf16.msra.mxu0 0
      %1381 = vmatprep.mubr.bf16.mxu0 0
      %1382 = vmatmul.mubr.bf16.gmra.mrb[0].mxu0 %v398
      %v1383 = vpop.f32.mrb[0].mxu0
      %v1384 = vadd.f32 0.0, %v1383
      %v1385 = vpop.f32.mrb[0].mxu0
      %v1386 = vpop.f32.mrb[0].mxu0
      %v1387 = vadd.f32 0.0, %v1386
      %v1388 = vpop.f32.mrb[0].mxu0
      %1389 = vmatprep.mubr.bf16.mxu0 0
      %1390 = vmatmul.mubr.bf16.gmra.mrb[0].mxu0 %v1299
      %v1391 = vpop.f32.mrb[0].mxu0
      %v1392 = vadd.f32 0.0, %v1391
      %v1393 = vpop.f32.mrb[0].mxu0
      %v1394 = vpop.f32.mrb[0].mxu0
      %v1395 = vadd.f32 0.0, %v1394
      %v1396 = vpop.f32.mrb[0].mxu0
      %1397 = vdwg.mxu0
      %v1398 = vadd.f32 %v1263, %v1384
      %v1399 = vadd.f32 %v1264, %v1387
      %v1400 = vadd.f32 %v1265, %v1392
      %v1401 = vadd.f32 %v1266, %v1395
      %v1403 = vrot.slane %v299, 5
      %v1404 = vrot.slane %v1403, 4
      %v1405 = vrot.slane %v300, 5
      %v1406 = vsel %vm613, %v1404, %v1405
      %s1407 = scalar_lea.vmem %s1, 512
      %v1408 = vld [vmem:[%s1407] sm:$0xf]
      %v1409 = vld [vmem:[%s1407 + $0x4] sm:$0xf]
      %v1410 = vld [vmem:[%s1407 + $0x8] sm:$0xf]
      %v1411 = vld [vmem:[%s1407 + $0xc] sm:$0xf]
      %v1412 = vld [vmem:[%s1407 + $0x10] sm:$0xf]
      %v1413 = vld [vmem:[%s1407 + $0x14] sm:$0xf]
      %v1414 = vld [vmem:[%s1407 + $0x18] sm:$0xf]
      %v1415 = vld [vmem:[%s1407 + $0x1c] sm:$0xf]
      %v1416 = vld [vmem:[%s1407 + $0x20] sm:$0xf]
      %v1417 = vld [vmem:[%s1407 + $0x24] sm:$0xf]
      %v1418 = vld [vmem:[%s1407 + $0x28] sm:$0xf]
      %v1419 = vld [vmem:[%s1407 + $0x2c] sm:$0xf]
      %v1420 = vld [vmem:[%s1407 + $0x30] sm:$0xf]
      %v1421 = vld [vmem:[%s1407 + $0x34] sm:$0xf]
      %v1422 = vld [vmem:[%s1407 + $0x38] sm:$0xf]
      %v1423 = vld [vmem:[%s1407 + $0x3c] sm:$0xf]
      %v1424 = vunpack.c.l.b16 %v1406
      %v1425 = vpack.c.b16 %v1424, %v1039
      %v1443 = vunpack.c.l.b16 %v1408
      %v1444 = vunpack.c.l.b16 %v1409
      %v1445 = vunpack.c.l.b16 %v1410
      %v1446 = vunpack.c.l.b16 %v1411
      %v1447 = vunpack.c.l.b16 %v1412
      %v1448 = vunpack.c.l.b16 %v1413
      %v1449 = vunpack.c.l.b16 %v1414
      %v1450 = vunpack.c.l.b16 %v1415
      %v1451 = vunpack.c.l.b16 %v1416
      %v1452 = vunpack.c.l.b16 %v1417
      %v1453 = vunpack.c.l.b16 %v1418
      %v1454 = vunpack.c.l.b16 %v1419
      %v1455 = vunpack.c.l.b16 %v1420
      %v1456 = vunpack.c.l.b16 %v1421
      %v1457 = vunpack.c.l.b16 %v1422
      %v1458 = vunpack.c.l.b16 %v1423
      %v1459 = vpack.c.b16 %v1444, %v1443
      %v1460 = vpack.c.b16 %v1446, %v1445
      %v1461 = vpack.c.b16 %v1448, %v1447
      %v1462 = vpack.c.b16 %v1450, %v1449
      %v1463 = vpack.c.b16 %v1452, %v1451
      %v1464 = vpack.c.b16 %v1454, %v1453
      %v1465 = vpack.c.b16 %v1456, %v1455
      %v1466 = vpack.c.b16 %v1458, %v1457
      %1475 = vmatprep.subr.bf16.mxu0 0
      %1476 = vmatpush1.bf16.msra.mxu0 %v1459
      %1477 = vmatprep.subr.bf16.mxu0 0
      %1478 = vmatpush1.bf16.msra.mxu0 %v1460
      %1479 = vmatprep.subr.bf16.mxu0 0
      %1480 = vmatpush1.bf16.msra.mxu0 %v1461
      %1481 = vmatprep.subr.bf16.mxu0 0
      %1482 = vmatpush1.bf16.msra.mxu0 %v1462
      %1483 = vmatprep.subr.bf16.mxu0 0
      %1484 = vmatpush1.bf16.msra.mxu0 %v1463
      %1485 = vmatprep.subr.bf16.mxu0 0
      %1486 = vmatpush1.bf16.msra.mxu0 %v1464
      %1487 = vmatprep.subr.bf16.mxu0 0
      %1488 = vmatpush1.bf16.msra.mxu0 %v1465
      %1489 = vmatprep.subr.bf16.mxu0 0
      %1490 = vmatpush1.bf16.msra.mxu0 %v1466
      %1491 = vmatprep.subr.bf16.mxu0 0
      %1492 = vmatpush1.bf16.msra.mxu0 0
      %1493 = vmatprep.subr.bf16.mxu0 0
      %1494 = vmatpush1.bf16.msra.mxu0 0
      %1495 = vmatprep.subr.bf16.mxu0 0
      %1496 = vmatpush1.bf16.msra.mxu0 0
      %1497 = vmatprep.subr.bf16.mxu0 0
      %1498 = vmatpush1.bf16.msra.mxu0 0
      %1499 = vmatprep.subr.bf16.mxu0 0
      %1500 = vmatpush1.bf16.msra.mxu0 0
      %1501 = vmatprep.subr.bf16.mxu0 0
      %1502 = vmatpush1.bf16.msra.mxu0 0
      %1503 = vmatprep.subr.bf16.mxu0 0
      %1504 = vmatpush1.bf16.msra.mxu0 0
      %1505 = vmatprep.subr.bf16.mxu0 0
      %1506 = vmatpush1.bf16.msra.mxu0 0
      %1507 = vmatprep.mubr.bf16.mxu0 0
      %1508 = vmatmul.mubr.bf16.gmra.mrb[0].mxu0 %v652
      %v1509 = vpop.f32.mrb[0].mxu0
      %v1510 = vadd.f32 0.0, %v1509
      %v1511 = vpop.f32.mrb[0].mxu0
      %v1512 = vpop.f32.mrb[0].mxu0
      %v1513 = vadd.f32 0.0, %v1512
      %v1514 = vpop.f32.mrb[0].mxu0
      %1515 = vmatprep.mubr.bf16.mxu0 0
      %1516 = vmatmul.mubr.bf16.gmra.mrb[0].mxu0 %v1425
      %v1517 = vpop.f32.mrb[0].mxu0
      %v1518 = vadd.f32 0.0, %v1517
      %v1519 = vpop.f32.mrb[0].mxu0
      %v1520 = vpop.f32.mrb[0].mxu0
      %v1521 = vadd.f32 0.0, %v1520
      %v1522 = vpop.f32.mrb[0].mxu0
      %1523 = vdwg.mxu0
      %v1524 = vadd.f32 %v1398, %v1510
      %v1525 = vadd.f32 %v1399, %v1513
      %v1526 = vadd.f32 %v1400, %v1518
      %v1527 = vadd.f32 %v1401, %v1521
      %v1528 = vld [vmem:[%s2] sm:$0x1]
      %v1530 = vlaneseq
      %v1531 = vshrl.u32 %v1530, 7
      %v1532 = vsub.s32 0, %v1531
      %v1533 = vrot.slane %v1528, %v1532
      %v1535 = vadd.f32 %v1524, %v1533
      %v1536 = vadd.f32 %v1525, %v1533
      %v1537 = vadd.f32 %v1526, %v1533
      %v1538 = vadd.f32 %v1527, %v1533
      %v1539 = vld [vmem:[%s272] sm:$0xf]
      %v1540 = vld [vmem:[%s272 + $0x4] sm:$0xf]
      %v1541 = vld [vmem:[%s272 + $0x8] sm:$0xf]
      %v1542 = vld [vmem:[%s272 + $0xc] sm:$0xf]
      %v1543 = vld [vmem:[%s4] sm:$0xf]
      %v1544 = vld [vmem:[%s4 + $0x4] sm:$0xf]
      %v1545 = vld [vmem:[%s4 + $0x8] sm:$0xf]
      %v1546 = vld [vmem:[%s4 + $0xc] sm:$0xf]
      %v1547 = vld [vmem:[%s4 + $0x10] sm:$0xf]
      %v1548 = vld [vmem:[%s4 + $0x14] sm:$0xf]
      %v1549 = vld [vmem:[%s4 + $0x18] sm:$0xf]
      %v1550 = vld [vmem:[%s4 + $0x1c] sm:$0xf]
      %v1555 = vunpack.c.l.b16 %v1539
      %v1556 = vunpack.c.l.b16 %v1540
      %v1557 = vunpack.c.l.b16 %v1541
      %v1558 = vunpack.c.l.b16 %v1542
      %v1559 = vpack.c.b16 %v1556, %v1555
      %v1560 = vpack.c.b16 %v1558, %v1557
      %v1569 = vunpack.c.l.b16 %v1543
      %v1570 = vunpack.c.l.b16 %v1544
      %v1571 = vunpack.c.l.b16 %v1545
      %v1572 = vunpack.c.l.b16 %v1546
      %v1573 = vunpack.c.l.b16 %v1547
      %v1574 = vunpack.c.l.b16 %v1548
      %v1575 = vunpack.c.l.b16 %v1549
      %v1576 = vunpack.c.l.b16 %v1550
      %v1577 = vpack.c.b16 %v1570, %v1569
      %v1578 = vpack.c.b16 %v1572, %v1571
      %v1579 = vpack.c.b16 %v1574, %v1573
      %v1580 = vpack.c.b16 %v1576, %v1575
      %vm1585 = vcmask 523264
      %v1587 = vsel %vm1585, %v1559, 0
      %v1590 = vsel %vm1585, %v1560, 0
      %1592 = vmatprep.subr.bf16.mxu0 0
      %1593 = vmatpush1.bf16.msra.mxu0 %v1577
      %1594 = vmatprep.subr.bf16.mxu0 0
      %1595 = vmatpush1.bf16.msra.mxu0 %v1578
      %1596 = vmatprep.subr.bf16.mxu0 0
      %1597 = vmatpush1.bf16.msra.mxu0 %v1579
      %1598 = vmatprep.subr.bf16.mxu0 0
      %1599 = vmatpush1.bf16.msra.mxu0 %v1580
      %1600 = vmatprep.subr.bf16.mxu0 0
      %1601 = vmatpush1.bf16.msra.mxu0 0
      %1602 = vmatprep.subr.bf16.mxu0 0
      %1603 = vmatpush1.bf16.msra.mxu0 0
      %1604 = vmatprep.subr.bf16.mxu0 0
      %1605 = vmatpush1.bf16.msra.mxu0 0
      %1606 = vmatprep.subr.bf16.mxu0 0
      %1607 = vmatpush1.bf16.msra.mxu0 0
      %1608 = vmatprep.subr.bf16.mxu0 0
      %1609 = vmatpush1.bf16.msra.mxu0 0
      %1610 = vmatprep.subr.bf16.mxu0 0
      %1611 = vmatpush1.bf16.msra.mxu0 0
      %1612 = vmatprep.subr.bf16.mxu0 0
      %1613 = vmatpush1.bf16.msra.mxu0 0
      %1614 = vmatprep.subr.bf16.mxu0 0
      %1615 = vmatpush1.bf16.msra.mxu0 0
      %1616 = vmatprep.subr.bf16.mxu0 0
      %1617 = vmatpush1.bf16.msra.mxu0 0
      %1618 = vmatprep.subr.bf16.mxu0 0
      %1619 = vmatpush1.bf16.msra.mxu0 0
      %1620 = vmatprep.subr.bf16.mxu0 0
      %1621 = vmatpush1.bf16.msra.mxu0 0
      %1622 = vmatprep.subr.bf16.mxu0 0
      %1623 = vmatpush1.bf16.msra.mxu0 0
      %1624 = vmatprep.mubr.bf16.mxu0 0
      %1625 = vmatmul.mubr.bf16.gmra.mrb[0].mxu0 %v1587
      %v1626 = vpop.f32.mrb[0].mxu0
      %v1627 = vadd.f32 0.0, %v1626
      %v1628 = vpop.f32.mrb[0].mxu0
      %v1629 = vpop.f32.mrb[0].mxu0
      %v1630 = vadd.f32 0.0, %v1629
      %v1631 = vpop.f32.mrb[0].mxu0
      %1632 = vmatprep.mubr.bf16.mxu0 0
      %1633 = vmatmul.mubr.bf16.gmra.mrb[0].mxu0 %v1590
      %v1634 = vpop.f32.mrb[0].mxu0
      %v1635 = vadd.f32 0.0, %v1634
      %v1636 = vpop.f32.mrb[0].mxu0
      %v1637 = vpop.f32.mrb[0].mxu0
      %v1638 = vadd.f32 0.0, %v1637
      %v1639 = vpop.f32.mrb[0].mxu0
      %1640 = vdwg.mxu0
      %v1641 = vadd.f32 %v1535, %v1627
      %v1642 = vadd.f32 %v1536, %v1630
      %v1643 = vadd.f32 %v1537, %v1635
      %v1644 = vadd.f32 %v1538, %v1638
      %v1645 = vmax.f32 %v1641, 0.0
      %v1646 = vmax.f32 %v1642, 0.0
      %v1647 = vmax.f32 %v1643, 0.0
      %v1648 = vmax.f32 %v1644, 0.0
      %v1649 = vpack.c.bf16 %v1645, %v1645
      %v1650 = vpack.c.bf16 %v1646, %v1646
      %v1651 = vpack.c.bf16 %v1647, %v1647
      %v1652 = vpack.c.bf16 %v1648, %v1648
      %1653 = vst [vmem:[%s282] sm:$0xf] %v1649
      %1654 = vst [vmem:[%s282 + $0x4] sm:$0xf] %v1650
      %1655 = vst [vmem:[%s282 + $0x8] sm:$0xf] %v1651
      %1656 = vst [vmem:[%s282 + $0xc] sm:$0xf] %v1652
      %s1657 = smul.u32 4, %s21
      %p1658 = scmp.lt.s32.totalorder %s20, 1
      %s1659 = scalar_select %p1658, %s20, 1
      %p1660 = scmp.lt.s32.totalorder %s1657, 7
      %s1661 = scalar_select %p1660, %s1657, 7
      %s1662 = smul.addr %s1659, 8
      %s1663 = sadd.s32 %s1661, %s1662
      %s1664 = smul.addr %s1663, 4
      %s1665 = scalar_lea.vmem %s5, %s1664
      // Predicated region
      $region41: #{basic_block_forward.3} parent=39 // pred_check
        %p1666 = pneg %p165
      $region42: #{basic_block_forward.3} parent=39 // pred_check_branch
        %1668 = sbr.rel (%p1666) target = $region44
      $region43: #{basic_block_forward.3} parent=39 // pred_region
        %s1669 = smul.u32 4, %s21
      $region44: #{basic_block_forward.3} parent=39 // pred_fallthru
        _
    $region40: #{basic_block_forward.3} parent=5 // pred_fallthru
      _
    %p1670 = scmp.le.s32.totalorder 2, %s11
    // Predicated region
    $region45: #{basic_block_forward.3} parent=5 // pred_check
      %p1671 = pneg %p1670
    $region46: #{basic_block_forward.3} parent=5 // pred_check_branch
      %1673 = sbr.rel (%p1671) target = $region48
    $region47: #{basic_block_forward.3} parent=5 // pred_region
      %s1674 = ssub.s32 %s11, 2
      // Predicated region
      $region49: #{basic_block_forward.3} parent=47 // pred_check
        %p1675 = pneg %p171
      $region50: #{basic_block_forward.3} parent=47 // pred_check_branch
        %1677 = sbr.rel (%p1675) target = $region52
      $region51: #{basic_block_forward.3} parent=47 // pred_region
        %s1678 = smul.u32 4, %s23
        %p1679 = scmp.lt.s32.totalorder %s22, 1
        %s1680 = scalar_select %p1679, %s22, 1
        %p1681 = scmp.lt.s32.totalorder %s1678, 7
        %s1682 = scalar_select %p1681, %s1678, 7
        %s1683 = smul.addr %s1680, 8
        %s1684 = sadd.s32 %s1682, %s1683
        %s1685 = smul.addr %s1684, 4
        %s1686 = scalar_lea.vmem %s5, %s1685
      $region52: #{basic_block_forward.3} parent=47 // pred_fallthru
        _
    $region48: #{basic_block_forward.3} parent=5 // pred_fallthru
      _
  $region6: #{basic_block_forward.3} parent=0 // loop_footer
    %s15 = sadd.s32 1, %s11
  $region7: #{basic_block_forward.3} parent=0 // loop_footer_branch
    %10 = sbr.rel target = $region3
  $region8: #{basic_block_forward.3} parent=0 // loop_exit
    _

</llo_original>
